<compile_context>
chip_gen: v7x
topology: tpu7x:2x2x1
jax: 0.10.0
libtpu: 0.0.40
codegen_flags: <defaults>
</compile_context>

<pallas_src>
import functools

import jax
import jax.numpy as jnp
from jax import lax
from jax.experimental import pallas as pl
from jax.experimental.pallas import tpu as pltpu

tag2idx = {'<PAD>': 0, 'O': 1, 'T-NEG': 2, 'T-NEU': 3, 'T-POS': 4}

NUM_LABELS = len(tag2idx)   # 5
EMB = 32                    # embedding_size
HID = EMB // 2              # LSTM hidden size per direction (16)
NUM_WORDS = 50
B = 2                       # batch
S = 8                       # sequence length


# ----------------------------------------------------------------------------
# Pallas kernel
# ----------------------------------------------------------------------------
def contextualized_kernel(
        x_ref, prev_ref,                         # (S*B, 2E), (S*B, L)
        wih_ref, whh_ref, bg_ref,                # fused BiLSTM params
        wh_hid_ref, wh_prev_ref, bh_ref,         # hidden Linear (split rows)
        wo_ref, bo_ref,                          # output Linear
        out_ref,                                 # (S*B, L)
        gx_ref, hs_ref,                          # VMEM scratch
        *, seq_len, batch, hid):
    D2 = 2 * hid  # fused (fwd|rev) hidden width

    # --- Phase 1: batched input projection for both directions, bias fused ---
    gx_ref[...] = (
        jnp.dot(x_ref[...], wih_ref[...], preferred_element_type=jnp.float32)
        + bg_ref[...])                                        # (S*B, 8H)

    # --- Phase 2: fused bidirectional recurrence, statically unrolled -------
    whh = whh_ref[...]                                        # hoisted load
    h = jnp.zeros((batch, D2), jnp.float32)                   # [h_fwd | h_rev]
    c = jnp.zeros((batch, D2), jnp.float32)
    for t in range(seq_len):
        r0 = t * batch
        gates = (gx_ref[r0:r0 + batch, :]
                 + jnp.dot(h, whh, preferred_element_type=jnp.float32))
        # gate column layout: [ i | f | o | g ], each D2 wide (fwd|rev halves)
        sig = jax.nn.sigmoid(gates[:, :3 * D2])               # 1 sigmoid
        g = jnp.tanh(gates[:, 3 * D2:])                       # 1 tanh
        i_g = sig[:, :D2]
        f_g = sig[:, D2:2 * D2]
        o_g = sig[:, 2 * D2:3 * D2]
        c = f_g * c + i_g * g
        h = o_g * jnp.tanh(c)
        # forward hidden belongs to time t; reverse hidden to time S-1-t
        hs_ref[r0:r0 + batch, :hid] = h[:, :hid]
        rr = (seq_len - 1 - t) * batch
        hs_ref[rr:rr + batch, hid:] = h[:, hid:]

    # --- Phase 3: time-batched MLP head (no loop) ----------------------------
    pre = (jnp.dot(hs_ref[...], wh_hid_ref[...],
                   preferred_element_type=jnp.float32)
           + jnp.dot(prev_ref[...], wh_prev_ref[...],
                     preferred_element_type=jnp.float32)
           + bh_ref[...])                                     # (S*B, F)
    hcur = jnp.tanh(pre)
    # eval-mode dropout == identity
    logits = (jnp.dot(hcur, wo_ref[...], preferred_element_type=jnp.float32)
              + bo_ref[...])                                  # (S*B, L)
    z = logits - jnp.max(logits, axis=-1, keepdims=True)
    e = jnp.exp(z)
    inv = pl.reciprocal(jnp.sum(e, axis=-1, keepdims=True), approx=True)
    out_ref[...] = e * inv                                    # single store


# ----------------------------------------------------------------------------
# Wrapper (plain-JAX glue: embedding gather + layout plumbing)
# ----------------------------------------------------------------------------
def contextualized_embeddings(sent, prev_labels, params):
    """sent: (B, S) int32; prev_labels: (B, S, L) float32 -> (B, S, L)."""
    x = jnp.take(params["embedding"], sent, axis=0).astype(jnp.float32)  # (B,S,E)
    Bsz, Ssz, E = x.shape
    L = params["wo_t"].shape[1]
    H = params["wh_hid"].shape[0] // 2

    x_tm = jnp.transpose(x, (1, 0, 2))                        # (S, B, E)
    # lanes 0:E = x_t (forward stream), lanes E:2E = x_{S-1-t} (reverse stream)
    x_cat = jnp.concatenate([x_tm, x_tm[::-1]], axis=-1)      # (S, B, 2E)
    x_flat = x_cat.reshape(Ssz * Bsz, 2 * E)
    prev_flat = jnp.transpose(prev_labels.astype(jnp.float32),
                              (1, 0, 2)).reshape(Ssz * Bsz, L)

    kernel = functools.partial(contextualized_kernel,
                               seq_len=Ssz, batch=Bsz, hid=H)
    vmem = pl.BlockSpec(memory_space=pltpu.MemorySpace.VMEM)

    out_flat = pl.pallas_call(
        kernel,
        out_shape=jax.ShapeDtypeStruct((Ssz * Bsz, L), jnp.float32),
        in_specs=[vmem] * 10,
        out_specs=vmem,
        scratch_shapes=[pltpu.VMEM((Ssz * Bsz, 8 * H), jnp.float32),  # gx
                        pltpu.VMEM((Ssz * Bsz, 2 * H), jnp.float32)], # hs
    )(x_flat, prev_flat,
      params["wih_big"], params["whh_big"], params["b_big"],
      params["wh_hid"], params["wh_prev"], params["bh"],
      params["wo_t"], params["bo"])

    return jnp.transpose(out_flat.reshape(Ssz, Bsz, L), (1, 0, 2))   # (B,S,L)


# ----------------------------------------------------------------------------
# Parameter construction (shapes from the nn.Module __init__)
# ----------------------------------------------------------------------------
def init_params(key, num_words, emb, num_labels):
    hid = emb // 2
    feat = emb + num_labels
    ks = jax.random.split(key, 13)

    def u(k, shape, scale):
        return jax.random.uniform(k, shape, jnp.float32, -scale, scale)

    # nn.Embedding(num_words, emb, padding_idx=0): row 0 is zero
    embedding = u(ks[0], (num_words, emb), 1.0).at[0].set(0.0)

    kl = 1.0 / jnp.sqrt(jnp.float32(hid))
    wih_f = u(ks[1], (4 * hid, emb), kl)   # PyTorch gate order: i, f, g, o
    whh_f = u(ks[2], (4 * hid, hid), kl)
    bih_f = u(ks[3], (4 * hid,), kl)
    bhh_f = u(ks[4], (4 * hid,), kl)
    wih_r = u(ks[5], (4 * hid, emb), kl)
    whh_r = u(ks[6], (4 * hid, hid), kl)
    bih_r = u(ks[7], (4 * hid,), kl)
    bhh_r = u(ks[8], (4 * hid,), kl)

    kh = 1.0 / jnp.sqrt(jnp.float32(feat))
    wh = u(ks[9], (feat, feat), kh)        # nn.Linear(feat, feat).weight
    bh = u(ks[10], (feat,), kh)
    wo = u(ks[11], (num_labels, feat), kh)  # nn.Linear(feat, num_labels).weight
    bo = u(ks[12], (num_labels,), kh)

    raw = dict(embedding=embedding,
               wih_f=wih_f, whh_f=whh_f, bih_f=bih_f, bhh_f=bhh_f,
               wih_r=wih_r, whh_r=whh_r, bih_r=bih_r, bhh_r=bhh_r,
               wh=wh, bh=bh, wo=wo, bo=bo)

    # ---- fused / reordered kernel-layout parameters -------------------------
    H, E, D2 = hid, emb, 2 * hid

    def gate_rows(w):
        return {"i": w[0:H], "f": w[H:2 * H], "g": w[2 * H:3 * H],
                "o": w[3 * H:4 * H]}

    gih_f, gih_r = gate_rows(wih_f), gate_rows(wih_r)
    ghh_f, ghh_r = gate_rows(whh_f), gate_rows(whh_r)
    bf, br = bih_f + bhh_f, bih_r + bhh_r
    gb_f = {"i": bf[0:H], "f": bf[H:2 * H], "g": bf[2 * H:3 * H],
            "o": bf[3 * H:4 * H]}
    gb_r = {"i": br[0:H], "f": br[H:2 * H], "g": br[2 * H:3 * H],
            "o": br[3 * H:4 * H]}

    # kernel gate layout: sigmoid gates (i, f, o) first, tanh gate (g) last;
    # within each gate: forward half then reverse half.
    order = ("i", "f", "o", "g")
    wih_big = jnp.zeros((2 * E, 4 * D2), jnp.float32)
    whh_big = jnp.zeros((D2, 4 * D2), jnp.float32)
    b_big = jnp.zeros((4 * D2,), jnp.float32)
    for gi, g in enumerate(order):
        c0 = gi * D2
        wih_big = wih_big.at[:E, c0:c0 + H].set(gih_f[g].T)
        wih_big = wih_big.at[E:, c0 + H:c0 + D2].set(gih_r[g].T)
        whh_big = whh_big.at[:H, c0:c0 + H].set(ghh_f[g].T)
        whh_big = whh_big.at[H:, c0 + H:c0 + D2].set(ghh_r[g].T)
        b_big = b_big.at[c0:c0 + H].set(gb_f[g])
        b_big = b_big.at[c0 + H:c0 + D2].set(gb_r[g])

    wh_t = wh.T                                   # (feat, feat), y = x @ W^T
    params = dict(raw)
    params.update({
        "wih_big": wih_big,                       # (2E, 8H)
        "whh_big": whh_big,                       # (2H, 8H) block-diagonal
        "b_big": b_big.reshape(1, 4 * D2),        # (1, 8H)
        "wh_hid": wh_t[:D2],                      # (2H, feat)
        "wh_prev": wh_t[D2:],                     # (L,  feat)
        "bh": bh.reshape(1, feat),
        "wo_t": wo.T,                             # (feat, L)
        "bo": bo.reshape(1, num_labels),
    })
    return params


# ----------------------------------------------------------------------------
# Pure-JAX reference (standard BiLSTM with the RAW weights) for sanity check
# ----------------------------------------------------------------------------
def reference(sent, prev_labels, params):
    x = jnp.take(params["embedding"], sent, axis=0)           # (B, S, E)
    Bsz = x.shape[0]
    H = params["whh_f"].shape[1]

    def run_dir(wih, whh, bih, bhh, reverse):
        bias = bih + bhh

        def step(carry, x_t):
            h, c = carry
            gates = x_t @ wih.T + h @ whh.T + bias
            i = jax.nn.sigmoid(gates[:, :H])
            f = jax.nn.sigmoid(gates[:, H:2 * H])
            g = jnp.tanh(gates[:, 2 * H:3 * H])
            o = jax.nn.sigmoid(gates[:, 3 * H:])
            c = f * c + i * g
            h = o * jnp.tanh(c)
            return (h, c), h

        xs = jnp.transpose(x, (1, 0, 2))
        if reverse:
            xs = xs[::-1]
        init = (jnp.zeros((Bsz, H)), jnp.zeros((Bsz, H)))
        _, hs = lax.scan(step, init, xs)
        if reverse:
            hs = hs[::-1]
        return jnp.transpose(hs, (1, 0, 2))                   # (B, S, H)

    hf = run_dir(params["wih_f"], params["whh_f"],
                 params["bih_f"], params["bhh_f"], False)
    hr = run_dir(params["wih_r"], params["whh_r"],
                 params["bih_r"], params["bhh_r"], True)
    y = jnp.concatenate([hf, hr, prev_labels], axis=-1)
    h = jnp.tanh(y @ params["wh"].T + params["bh"])           # dropout = identity
    logits = h @ params["wo"].T + params["bo"]
    return jax.nn.softmax(logits, axis=2)


if __name__ == "__main__":
    key = jax.random.PRNGKey(0)
    kp, ksent, klab = jax.random.split(key, 3)

    params = init_params(kp, NUM_WORDS, EMB, NUM_LABELS)
    sent = jax.random.randint(ksent, (B, S), 0, NUM_WORDS, dtype=jnp.int32)
    prev_labels = jax.nn.softmax(
        jax.random.uniform(klab, (B, S, NUM_LABELS), jnp.float32), axis=-1)

    out = contextualized_embeddings(sent, prev_labels, params)
    out = jax.block_until_ready(out)

    ref = reference(sent, prev_labels, params)
    assert out.shape == (B, S, NUM_LABELS)
    # approx reciprocal in the softmax denominator -> ~1e-3-level agreement
    assert jnp.allclose(out, ref, atol=2e-3, rtol=2e-3)
    print("KERNEL_OK")
</pallas_src>

<mosaic_0001>
module attributes {stable_mosaic.version = 11 : i64} {
  func.func @contextualized_kernel(%arg0: memref<16x64xf32, #tpu.memory_space<vmem>>, %arg1: memref<16x5xf32, #tpu.memory_space<vmem>>, %arg2: memref<64x128xf32, #tpu.memory_space<vmem>>, %arg3: memref<32x128xf32, #tpu.memory_space<vmem>>, %arg4: memref<1x128xf32, #tpu.memory_space<vmem>>, %arg5: memref<32x37xf32, #tpu.memory_space<vmem>>, %arg6: memref<5x37xf32, #tpu.memory_space<vmem>>, %arg7: memref<1x37xf32, #tpu.memory_space<vmem>>, %arg8: memref<37x5xf32, #tpu.memory_space<vmem>>, %arg9: memref<1x5xf32, #tpu.memory_space<vmem>>, %arg10: memref<16x5xf32, #tpu.memory_space<vmem>>, %arg11: memref<16x128xf32, #tpu.memory_space<vmem>>, %arg12: memref<16x32xf32, #tpu.memory_space<vmem>>) attributes {dimension_semantics = [], scalar_prefetch = 0 : i64, scratch_operands = 2 : i64, tpu.core_type = #tpu.core_type<tc>} {
    %c0 = arith.constant 0 : index
    %c0_0 = arith.constant 0 : index
    %0 = vector.load %arg0[%c0, %c0_0] : memref<16x64xf32, #tpu.memory_space<vmem>>, vector<16x64xf32>
    %c0_1 = arith.constant 0 : index
    %c0_2 = arith.constant 0 : index
    %1 = vector.load %arg2[%c0_1, %c0_2] : memref<64x128xf32, #tpu.memory_space<vmem>>, vector<64x128xf32>
    %cst = arith.constant dense<0.000000e+00> : vector<16x128xf32>
    %2 = tpu.matmul %0, %1, %cst {dimension_numbers = #tpu.dot_dimension_numbers<[1], [0], [0], [1], [0, 0, 1, 1], [], []>} : vector<16x64xf32>, vector<64x128xf32>, vector<16x128xf32> -> vector<16x128xf32>
    %c0_3 = arith.constant 0 : index
    %c0_4 = arith.constant 0 : index
    %3 = vector.load %arg4[%c0_3, %c0_4] : memref<1x128xf32, #tpu.memory_space<vmem>>, vector<1x128xf32>
    %4 = vector.broadcast %3 : vector<1x128xf32> to vector<16x128xf32>
    %5 = arith.addf %2, %4 : vector<16x128xf32>
    %c0_5 = arith.constant 0 : index
    %c0_6 = arith.constant 0 : index
    %6 = vector.load %arg11[%c0_5, %c0_6] : memref<16x128xf32, #tpu.memory_space<vmem>>, vector<16x128xf32>
    tpu.vector_store %arg11[%c0_5, %c0_6], %5 {strides = array<i32>} : memref<16x128xf32, #tpu.memory_space<vmem>>, vector<16x128xf32>,
    %c0_7 = arith.constant 0 : index
    %c0_8 = arith.constant 0 : index
    %7 = vector.load %arg3[%c0_7, %c0_8] : memref<32x128xf32, #tpu.memory_space<vmem>>, vector<32x128xf32>
    %cst_9 = arith.constant 0.000000e+00 : f32
    %8 = vector.broadcast %cst_9 : f32 to vector<2x32xf32>
    %cst_10 = arith.constant 0.000000e+00 : f32
    %9 = vector.broadcast %cst_10 : f32 to vector<2x32xf32>
    %c0_11 = arith.constant 0 : index
    %c0_12 = arith.constant 0 : index
    %10 = vector.load %arg11[%c0_11, %c0_12] : memref<16x128xf32, #tpu.memory_space<vmem>>, vector<2x128xf32>
    %cst_13 = arith.constant dense<0.000000e+00> : vector<2x128xf32>
    %11 = tpu.matmul %8, %7, %cst_13 {dimension_numbers = #tpu.dot_dimension_numbers<[1], [0], [0], [1], [0, 0, 1, 1], [], []>} : vector<2x32xf32>, vector<32x128xf32>, vector<2x128xf32> -> vector<2x128xf32>
    %12 = arith.addf %10, %11 : vector<2x128xf32>
    %13 = vector.extract_strided_slice %12 {offsets = [0, 0], sizes = [2, 96], strides = [1, 1]} : vector<2x128xf32> to vector<2x96xf32>
    %14 = arith.negf %13 : vector<2x96xf32>
    %15 = math.exp %14 : vector<2x96xf32>
    %cst_14 = arith.constant 1.000000e+00 : f32
    %16 = vector.broadcast %cst_14 : f32 to vector<2x96xf32>
    %17 = arith.addf %16, %15 : vector<2x96xf32>
    %18 = arith.divf %16, %17 : vector<2x96xf32>
    %19 = vector.extract_strided_slice %12 {offsets = [0, 96], sizes = [2, 32], strides = [1, 1]} : vector<2x128xf32> to vector<2x32xf32>
    %20 = math.tanh %19 : vector<2x32xf32>
    %21 = vector.extract_strided_slice %18 {offsets = [0, 0], sizes = [2, 32], strides = [1, 1]} : vector<2x96xf32> to vector<2x32xf32>
    %22 = vector.extract_strided_slice %18 {offsets = [0, 32], sizes = [2, 32], strides = [1, 1]} : vector<2x96xf32> to vector<2x32xf32>
    %23 = vector.extract_strided_slice %18 {offsets = [0, 64], sizes = [2, 32], strides = [1, 1]} : vector<2x96xf32> to vector<2x32xf32>
    %24 = arith.mulf %22, %9 : vector<2x32xf32>
    %25 = arith.mulf %21, %20 : vector<2x32xf32>
    %26 = arith.addf %24, %25 : vector<2x32xf32>
    %27 = math.tanh %26 : vector<2x32xf32>
    %28 = arith.mulf %23, %27 : vector<2x32xf32>
    %29 = vector.extract_strided_slice %28 {offsets = [0, 0], sizes = [2, 16], strides = [1, 1]} : vector<2x32xf32> to vector<2x16xf32>
    %c0_15 = arith.constant 0 : index
    %c0_16 = arith.constant 0 : index
    %30 = vector.load %arg12[%c0_15, %c0_16] : memref<16x32xf32, #tpu.memory_space<vmem>>, vector<2x16xf32>
    tpu.vector_store %arg12[%c0_15, %c0_16], %29 {strides = array<i32>} : memref<16x32xf32, #tpu.memory_space<vmem>>, vector<2x16xf32>,
    %31 = vector.extract_strided_slice %28 {offsets = [0, 16], sizes = [2, 16], strides = [1, 1]} : vector<2x32xf32> to vector<2x16xf32>
    %c14 = arith.constant 14 : index
    %c16 = arith.constant 16 : index
    %32 = vector.load %arg12[%c14, %c16] : memref<16x32xf32, #tpu.memory_space<vmem>>, vector<2x16xf32>
    tpu.vector_store %arg12[%c14, %c16], %31 {strides = array<i32>} : memref<16x32xf32, #tpu.memory_space<vmem>>, vector<2x16xf32>,
    %c2 = arith.constant 2 : index
    %c0_17 = arith.constant 0 : index
    %33 = vector.load %arg11[%c2, %c0_17] : memref<16x128xf32, #tpu.memory_space<vmem>>, vector<2x128xf32>
    %cst_18 = arith.constant dense<0.000000e+00> : vector<2x128xf32>
    %34 = tpu.matmul %28, %7, %cst_18 {dimension_numbers = #tpu.dot_dimension_numbers<[1], [0], [0], [1], [0, 0, 1, 1], [], []>} : vector<2x32xf32>, vector<32x128xf32>, vector<2x128xf32> -> vector<2x128xf32>
    %35 = arith.addf %33, %34 : vector<2x128xf32>
    %36 = vector.extract_strided_slice %35 {offsets = [0, 0], sizes = [2, 96], strides = [1, 1]} : vector<2x128xf32> to vector<2x96xf32>
    %37 = arith.negf %36 : vector<2x96xf32>
    %38 = math.exp %37 : vector<2x96xf32>
    %cst_19 = arith.constant 1.000000e+00 : f32
    %39 = vector.broadcast %cst_19 : f32 to vector<2x96xf32>
    %40 = arith.addf %39, %38 : vector<2x96xf32>
    %41 = arith.divf %39, %40 : vector<2x96xf32>
    %42 = vector.extract_strided_slice %35 {offsets = [0, 96], sizes = [2, 32], strides = [1, 1]} : vector<2x128xf32> to vector<2x32xf32>
    %43 = math.tanh %42 : vector<2x32xf32>
    %44 = vector.extract_strided_slice %41 {offsets = [0, 0], sizes = [2, 32], strides = [1, 1]} : vector<2x96xf32> to vector<2x32xf32>
    %45 = vector.extract_strided_slice %41 {offsets = [0, 32], sizes = [2, 32], strides = [1, 1]} : vector<2x96xf32> to vector<2x32xf32>
    %46 = vector.extract_strided_slice %41 {offsets = [0, 64], sizes = [2, 32], strides = [1, 1]} : vector<2x96xf32> to vector<2x32xf32>
    %47 = arith.mulf %45, %26 : vector<2x32xf32>
    %48 = arith.mulf %44, %43 : vector<2x32xf32>
    %49 = arith.addf %47, %48 : vector<2x32xf32>
    %50 = math.tanh %49 : vector<2x32xf32>
    %51 = arith.mulf %46, %50 : vector<2x32xf32>
    %52 = vector.extract_strided_slice %51 {offsets = [0, 0], sizes = [2, 16], strides = [1, 1]} : vector<2x32xf32> to vector<2x16xf32>
    %c2_20 = arith.constant 2 : index
    %c0_21 = arith.constant 0 : index
    %53 = vector.load %arg12[%c2_20, %c0_21] : memref<16x32xf32, #tpu.memory_space<vmem>>, vector<2x16xf32>
    tpu.vector_store %arg12[%c2_20, %c0_21], %52 {strides = array<i32>} : memref<16x32xf32, #tpu.memory_space<vmem>>, vector<2x16xf32>,
    %54 = vector.extract_strided_slice %51 {offsets = [0, 16], sizes = [2, 16], strides = [1, 1]} : vector<2x32xf32> to vector<2x16xf32>
    %c12 = arith.constant 12 : index
    %c16_22 = arith.constant 16 : index
    %55 = vector.load %arg12[%c12, %c16_22] : memref<16x32xf32, #tpu.memory_space<vmem>>, vector<2x16xf32>
    tpu.vector_store %arg12[%c12, %c16_22], %54 {strides = array<i32>} : memref<16x32xf32, #tpu.memory_space<vmem>>, vector<2x16xf32>,
    %c4 = arith.constant 4 : index
    %c0_23 = arith.constant 0 : index
    %56 = vector.load %arg11[%c4, %c0_23] : memref<16x128xf32, #tpu.memory_space<vmem>>, vector<2x128xf32>
    %cst_24 = arith.constant dense<0.000000e+00> : vector<2x128xf32>
    %57 = tpu.matmul %51, %7, %cst_24 {dimension_numbers = #tpu.dot_dimension_numbers<[1], [0], [0], [1], [0, 0, 1, 1], [], []>} : vector<2x32xf32>, vector<32x128xf32>, vector<2x128xf32> -> vector<2x128xf32>
    %58 = arith.addf %56, %57 : vector<2x128xf32>
    %59 = vector.extract_strided_slice %58 {offsets = [0, 0], sizes = [2, 96], strides = [1, 1]} : vector<2x128xf32> to vector<2x96xf32>
    %60 = arith.negf %59 : vector<2x96xf32>
    %61 = math.exp %60 : vector<2x96xf32>
    %cst_25 = arith.constant 1.000000e+00 : f32
    %62 = vector.broadcast %cst_25 : f32 to vector<2x96xf32>
    %63 = arith.addf %62, %61 : vector<2x96xf32>
    %64 = arith.divf %62, %63 : vector<2x96xf32>
    %65 = vector.extract_strided_slice %58 {offsets = [0, 96], sizes = [2, 32], strides = [1, 1]} : vector<2x128xf32> to vector<2x32xf32>
    %66 = math.tanh %65 : vector<2x32xf32>
    %67 = vector.extract_strided_slice %64 {offsets = [0, 0], sizes = [2, 32], strides = [1, 1]} : vector<2x96xf32> to vector<2x32xf32>
    %68 = vector.extract_strided_slice %64 {offsets = [0, 32], sizes = [2, 32], strides = [1, 1]} : vector<2x96xf32> to vector<2x32xf32>
    %69 = vector.extract_strided_slice %64 {offsets = [0, 64], sizes = [2, 32], strides = [1, 1]} : vector<2x96xf32> to vector<2x32xf32>
    %70 = arith.mulf %68, %49 : vector<2x32xf32>
    %71 = arith.mulf %67, %66 : vector<2x32xf32>
    %72 = arith.addf %70, %71 : vector<2x32xf32>
    %73 = math.tanh %72 : vector<2x32xf32>
    %74 = arith.mulf %69, %73 : vector<2x32xf32>
    %75 = vector.extract_strided_slice %74 {offsets = [0, 0], sizes = [2, 16], strides = [1, 1]} : vector<2x32xf32> to vector<2x16xf32>
    %c4_26 = arith.constant 4 : index
    %c0_27 = arith.constant 0 : index
    %76 = vector.load %arg12[%c4_26, %c0_27] : memref<16x32xf32, #tpu.memory_space<vmem>>, vector<2x16xf32>
    tpu.vector_store %arg12[%c4_26, %c0_27], %75 {strides = array<i32>} : memref<16x32xf32, #tpu.memory_space<vmem>>, vector<2x16xf32>,
    %77 = vector.extract_strided_slice %74 {offsets = [0, 16], sizes = [2, 16], strides = [1, 1]} : vector<2x32xf32> to vector<2x16xf32>
    %c10 = arith.constant 10 : index
    %c16_28 = arith.constant 16 : index
    %78 = vector.load %arg12[%c10, %c16_28] : memref<16x32xf32, #tpu.memory_space<vmem>>, vector<2x16xf32>
    tpu.vector_store %arg12[%c10, %c16_28], %77 {strides = array<i32>} : memref<16x32xf32, #tpu.memory_space<vmem>>, vector<2x16xf32>,
    %c6 = arith.constant 6 : index
    %c0_29 = arith.constant 0 : index
    %79 = vector.load %arg11[%c6, %c0_29] : memref<16x128xf32, #tpu.memory_space<vmem>>, vector<2x128xf32>
    %cst_30 = arith.constant dense<0.000000e+00> : vector<2x128xf32>
    %80 = tpu.matmul %74, %7, %cst_30 {dimension_numbers = #tpu.dot_dimension_numbers<[1], [0], [0], [1], [0, 0, 1, 1], [], []>} : vector<2x32xf32>, vector<32x128xf32>, vector<2x128xf32> -> vector<2x128xf32>
    %81 = arith.addf %79, %80 : vector<2x128xf32>
    %82 = vector.extract_strided_slice %81 {offsets = [0, 0], sizes = [2, 96], strides = [1, 1]} : vector<2x128xf32> to vector<2x96xf32>
    %83 = arith.negf %82 : vector<2x96xf32>
    %84 = math.exp %83 : vector<2x96xf32>
    %cst_31 = arith.constant 1.000000e+00 : f32
    %85 = vector.broadcast %cst_31 : f32 to vector<2x96xf32>
    %86 = arith.addf %85, %84 : vector<2x96xf32>
    %87 = arith.divf %85, %86 : vector<2x96xf32>
    %88 = vector.extract_strided_slice %81 {offsets = [0, 96], sizes = [2, 32], strides = [1, 1]} : vector<2x128xf32> to vector<2x32xf32>
    %89 = math.tanh %88 : vector<2x32xf32>
    %90 = vector.extract_strided_slice %87 {offsets = [0, 0], sizes = [2, 32], strides = [1, 1]} : vector<2x96xf32> to vector<2x32xf32>
    %91 = vector.extract_strided_slice %87 {offsets = [0, 32], sizes = [2, 32], strides = [1, 1]} : vector<2x96xf32> to vector<2x32xf32>
    %92 = vector.extract_strided_slice %87 {offsets = [0, 64], sizes = [2, 32], strides = [1, 1]} : vector<2x96xf32> to vector<2x32xf32>
    %93 = arith.mulf %91, %72 : vector<2x32xf32>
    %94 = arith.mulf %90, %89 : vector<2x32xf32>
    %95 = arith.addf %93, %94 : vector<2x32xf32>
    %96 = math.tanh %95 : vector<2x32xf32>
    %97 = arith.mulf %92, %96 : vector<2x32xf32>
    %98 = vector.extract_strided_slice %97 {offsets = [0, 0], sizes = [2, 16], strides = [1, 1]} : vector<2x32xf32> to vector<2x16xf32>
    %c6_32 = arith.constant 6 : index
    %c0_33 = arith.constant 0 : index
    %99 = vector.load %arg12[%c6_32, %c0_33] : memref<16x32xf32, #tpu.memory_space<vmem>>, vector<2x16xf32>
    tpu.vector_store %arg12[%c6_32, %c0_33], %98 {strides = array<i32>} : memref<16x32xf32, #tpu.memory_space<vmem>>, vector<2x16xf32>,
    %100 = vector.extract_strided_slice %97 {offsets = [0, 16], sizes = [2, 16], strides = [1, 1]} : vector<2x32xf32> to vector<2x16xf32>
    %c8 = arith.constant 8 : index
    %c16_34 = arith.constant 16 : index
    %101 = vector.load %arg12[%c8, %c16_34] : memref<16x32xf32, #tpu.memory_space<vmem>>, vector<2x16xf32>
    tpu.vector_store %arg12[%c8, %c16_34], %100 {strides = array<i32>} : memref<16x32xf32, #tpu.memory_space<vmem>>, vector<2x16xf32>,
    %c8_35 = arith.constant 8 : index
    %c0_36 = arith.constant 0 : index
    %102 = vector.load %arg11[%c8_35, %c0_36] : memref<16x128xf32, #tpu.memory_space<vmem>>, vector<2x128xf32>
    %cst_37 = arith.constant dense<0.000000e+00> : vector<2x128xf32>
    %103 = tpu.matmul %97, %7, %cst_37 {dimension_numbers = #tpu.dot_dimension_numbers<[1], [0], [0], [1], [0, 0, 1, 1], [], []>} : vector<2x32xf32>, vector<32x128xf32>, vector<2x128xf32> -> vector<2x128xf32>
    %104 = arith.addf %102, %103 : vector<2x128xf32>
    %105 = vector.extract_strided_slice %104 {offsets = [0, 0], sizes = [2, 96], strides = [1, 1]} : vector<2x128xf32> to vector<2x96xf32>
    %106 = arith.negf %105 : vector<2x96xf32>
    %107 = math.exp %106 : vector<2x96xf32>
    %cst_38 = arith.constant 1.000000e+00 : f32
    %108 = vector.broadcast %cst_38 : f32 to vector<2x96xf32>
    %109 = arith.addf %108, %107 : vector<2x96xf32>
    %110 = arith.divf %108, %109 : vector<2x96xf32>
    %111 = vector.extract_strided_slice %104 {offsets = [0, 96], sizes = [2, 32], strides = [1, 1]} : vector<2x128xf32> to vector<2x32xf32>
    %112 = math.tanh %111 : vector<2x32xf32>
    %113 = vector.extract_strided_slice %110 {offsets = [0, 0], sizes = [2, 32], strides = [1, 1]} : vector<2x96xf32> to vector<2x32xf32>
    %114 = vector.extract_strided_slice %110 {offsets = [0, 32], sizes = [2, 32], strides = [1, 1]} : vector<2x96xf32> to vector<2x32xf32>
    %115 = vector.extract_strided_slice %110 {offsets = [0, 64], sizes = [2, 32], strides = [1, 1]} : vector<2x96xf32> to vector<2x32xf32>
    %116 = arith.mulf %114, %95 : vector<2x32xf32>
    %117 = arith.mulf %113, %112 : vector<2x32xf32>
    %118 = arith.addf %116, %117 : vector<2x32xf32>
    %119 = math.tanh %118 : vector<2x32xf32>
    %120 = arith.mulf %115, %119 : vector<2x32xf32>
    %121 = vector.extract_strided_slice %120 {offsets = [0, 0], sizes = [2, 16], strides = [1, 1]} : vector<2x32xf32> to vector<2x16xf32>
    %c8_39 = arith.constant 8 : index
    %c0_40 = arith.constant 0 : index
    %122 = vector.load %arg12[%c8_39, %c0_40] : memref<16x32xf32, #tpu.memory_space<vmem>>, vector<2x16xf32>
    tpu.vector_store %arg12[%c8_39, %c0_40], %121 {strides = array<i32>} : memref<16x32xf32, #tpu.memory_space<vmem>>, vector<2x16xf32>,
    %123 = vector.extract_strided_slice %120 {offsets = [0, 16], sizes = [2, 16], strides = [1, 1]} : vector<2x32xf32> to vector<2x16xf32>
    %c6_41 = arith.constant 6 : index
    %c16_42 = arith.constant 16 : index
    %124 = vector.load %arg12[%c6_41, %c16_42] : memref<16x32xf32, #tpu.memory_space<vmem>>, vector<2x16xf32>
    tpu.vector_store %arg12[%c6_41, %c16_42], %123 {strides = array<i32>} : memref<16x32xf32, #tpu.memory_space<vmem>>, vector<2x16xf32>,
    %c10_43 = arith.constant 10 : index
    %c0_44 = arith.constant 0 : index
    %125 = vector.load %arg11[%c10_43, %c0_44] : memref<16x128xf32, #tpu.memory_space<vmem>>, vector<2x128xf32>
    %cst_45 = arith.constant dense<0.000000e+00> : vector<2x128xf32>
    %126 = tpu.matmul %120, %7, %cst_45 {dimension_numbers = #tpu.dot_dimension_numbers<[1], [0], [0], [1], [0, 0, 1, 1], [], []>} : vector<2x32xf32>, vector<32x128xf32>, vector<2x128xf32> -> vector<2x128xf32>
    %127 = arith.addf %125, %126 : vector<2x128xf32>
    %128 = vector.extract_strided_slice %127 {offsets = [0, 0], sizes = [2, 96], strides = [1, 1]} : vector<2x128xf32> to vector<2x96xf32>
    %129 = arith.negf %128 : vector<2x96xf32>
    %130 = math.exp %129 : vector<2x96xf32>
    %cst_46 = arith.constant 1.000000e+00 : f32
    %131 = vector.broadcast %cst_46 : f32 to vector<2x96xf32>
    %132 = arith.addf %131, %130 : vector<2x96xf32>
    %133 = arith.divf %131, %132 : vector<2x96xf32>
    %134 = vector.extract_strided_slice %127 {offsets = [0, 96], sizes = [2, 32], strides = [1, 1]} : vector<2x128xf32> to vector<2x32xf32>
    %135 = math.tanh %134 : vector<2x32xf32>
    %136 = vector.extract_strided_slice %133 {offsets = [0, 0], sizes = [2, 32], strides = [1, 1]} : vector<2x96xf32> to vector<2x32xf32>
    %137 = vector.extract_strided_slice %133 {offsets = [0, 32], sizes = [2, 32], strides = [1, 1]} : vector<2x96xf32> to vector<2x32xf32>
    %138 = vector.extract_strided_slice %133 {offsets = [0, 64], sizes = [2, 32], strides = [1, 1]} : vector<2x96xf32> to vector<2x32xf32>
    %139 = arith.mulf %137, %118 : vector<2x32xf32>
    %140 = arith.mulf %136, %135 : vector<2x32xf32>
    %141 = arith.addf %139, %140 : vector<2x32xf32>
    %142 = math.tanh %141 : vector<2x32xf32>
    %143 = arith.mulf %138, %142 : vector<2x32xf32>
    %144 = vector.extract_strided_slice %143 {offsets = [0, 0], sizes = [2, 16], strides = [1, 1]} : vector<2x32xf32> to vector<2x16xf32>
    %c10_47 = arith.constant 10 : index
    %c0_48 = arith.constant 0 : index
    %145 = vector.load %arg12[%c10_47, %c0_48] : memref<16x32xf32, #tpu.memory_space<vmem>>, vector<2x16xf32>
    tpu.vector_store %arg12[%c10_47, %c0_48], %144 {strides = array<i32>} : memref<16x32xf32, #tpu.memory_space<vmem>>, vector<2x16xf32>,
    %146 = vector.extract_strided_slice %143 {offsets = [0, 16], sizes = [2, 16], strides = [1, 1]} : vector<2x32xf32> to vector<2x16xf32>
    %c4_49 = arith.constant 4 : index
    %c16_50 = arith.constant 16 : index
    %147 = vector.load %arg12[%c4_49, %c16_50] : memref<16x32xf32, #tpu.memory_space<vmem>>, vector<2x16xf32>
    tpu.vector_store %arg12[%c4_49, %c16_50], %146 {strides = array<i32>} : memref<16x32xf32, #tpu.memory_space<vmem>>, vector<2x16xf32>,
    %c12_51 = arith.constant 12 : index
    %c0_52 = arith.constant 0 : index
    %148 = vector.load %arg11[%c12_51, %c0_52] : memref<16x128xf32, #tpu.memory_space<vmem>>, vector<2x128xf32>
    %cst_53 = arith.constant dense<0.000000e+00> : vector<2x128xf32>
    %149 = tpu.matmul %143, %7, %cst_53 {dimension_numbers = #tpu.dot_dimension_numbers<[1], [0], [0], [1], [0, 0, 1, 1], [], []>} : vector<2x32xf32>, vector<32x128xf32>, vector<2x128xf32> -> vector<2x128xf32>
    %150 = arith.addf %148, %149 : vector<2x128xf32>
    %151 = vector.extract_strided_slice %150 {offsets = [0, 0], sizes = [2, 96], strides = [1, 1]} : vector<2x128xf32> to vector<2x96xf32>
    %152 = arith.negf %151 : vector<2x96xf32>
    %153 = math.exp %152 : vector<2x96xf32>
    %cst_54 = arith.constant 1.000000e+00 : f32
    %154 = vector.broadcast %cst_54 : f32 to vector<2x96xf32>
    %155 = arith.addf %154, %153 : vector<2x96xf32>
    %156 = arith.divf %154, %155 : vector<2x96xf32>
    %157 = vector.extract_strided_slice %150 {offsets = [0, 96], sizes = [2, 32], strides = [1, 1]} : vector<2x128xf32> to vector<2x32xf32>
    %158 = math.tanh %157 : vector<2x32xf32>
    %159 = vector.extract_strided_slice %156 {offsets = [0, 0], sizes = [2, 32], strides = [1, 1]} : vector<2x96xf32> to vector<2x32xf32>
    %160 = vector.extract_strided_slice %156 {offsets = [0, 32], sizes = [2, 32], strides = [1, 1]} : vector<2x96xf32> to vector<2x32xf32>
    %161 = vector.extract_strided_slice %156 {offsets = [0, 64], sizes = [2, 32], strides = [1, 1]} : vector<2x96xf32> to vector<2x32xf32>
    %162 = arith.mulf %160, %141 : vector<2x32xf32>
    %163 = arith.mulf %159, %158 : vector<2x32xf32>
    %164 = arith.addf %162, %163 : vector<2x32xf32>
    %165 = math.tanh %164 : vector<2x32xf32>
    %166 = arith.mulf %161, %165 : vector<2x32xf32>
    %167 = vector.extract_strided_slice %166 {offsets = [0, 0], sizes = [2, 16], strides = [1, 1]} : vector<2x32xf32> to vector<2x16xf32>
    %c12_55 = arith.constant 12 : index
    %c0_56 = arith.constant 0 : index
    %168 = vector.load %arg12[%c12_55, %c0_56] : memref<16x32xf32, #tpu.memory_space<vmem>>, vector<2x16xf32>
    tpu.vector_store %arg12[%c12_55, %c0_56], %167 {strides = array<i32>} : memref<16x32xf32, #tpu.memory_space<vmem>>, vector<2x16xf32>,
    %169 = vector.extract_strided_slice %166 {offsets = [0, 16], sizes = [2, 16], strides = [1, 1]} : vector<2x32xf32> to vector<2x16xf32>
    %c2_57 = arith.constant 2 : index
    %c16_58 = arith.constant 16 : index
    %170 = vector.load %arg12[%c2_57, %c16_58] : memref<16x32xf32, #tpu.memory_space<vmem>>, vector<2x16xf32>
    tpu.vector_store %arg12[%c2_57, %c16_58], %169 {strides = array<i32>} : memref<16x32xf32, #tpu.memory_space<vmem>>, vector<2x16xf32>,
    %c14_59 = arith.constant 14 : index
    %c0_60 = arith.constant 0 : index
    %171 = vector.load %arg11[%c14_59, %c0_60] : memref<16x128xf32, #tpu.memory_space<vmem>>, vector<2x128xf32>
    %cst_61 = arith.constant dense<0.000000e+00> : vector<2x128xf32>
    %172 = tpu.matmul %166, %7, %cst_61 {dimension_numbers = #tpu.dot_dimension_numbers<[1], [0], [0], [1], [0, 0, 1, 1], [], []>} : vector<2x32xf32>, vector<32x128xf32>, vector<2x128xf32> -> vector<2x128xf32>
    %173 = arith.addf %171, %172 : vector<2x128xf32>
    %174 = vector.extract_strided_slice %173 {offsets = [0, 0], sizes = [2, 96], strides = [1, 1]} : vector<2x128xf32> to vector<2x96xf32>
    %175 = arith.negf %174 : vector<2x96xf32>
    %176 = math.exp %175 : vector<2x96xf32>
    %cst_62 = arith.constant 1.000000e+00 : f32
    %177 = vector.broadcast %cst_62 : f32 to vector<2x96xf32>
    %178 = arith.addf %177, %176 : vector<2x96xf32>
    %179 = arith.divf %177, %178 : vector<2x96xf32>
    %180 = vector.extract_strided_slice %173 {offsets = [0, 96], sizes = [2, 32], strides = [1, 1]} : vector<2x128xf32> to vector<2x32xf32>
    %181 = math.tanh %180 : vector<2x32xf32>
    %182 = vector.extract_strided_slice %179 {offsets = [0, 0], sizes = [2, 32], strides = [1, 1]} : vector<2x96xf32> to vector<2x32xf32>
    %183 = vector.extract_strided_slice %179 {offsets = [0, 32], sizes = [2, 32], strides = [1, 1]} : vector<2x96xf32> to vector<2x32xf32>
    %184 = vector.extract_strided_slice %179 {offsets = [0, 64], sizes = [2, 32], strides = [1, 1]} : vector<2x96xf32> to vector<2x32xf32>
    %185 = arith.mulf %183, %164 : vector<2x32xf32>
    %186 = arith.mulf %182, %181 : vector<2x32xf32>
    %187 = arith.addf %185, %186 : vector<2x32xf32>
    %188 = math.tanh %187 : vector<2x32xf32>
    %189 = arith.mulf %184, %188 : vector<2x32xf32>
    %190 = vector.extract_strided_slice %189 {offsets = [0, 0], sizes = [2, 16], strides = [1, 1]} : vector<2x32xf32> to vector<2x16xf32>
    %c14_63 = arith.constant 14 : index
    %c0_64 = arith.constant 0 : index
    %191 = vector.load %arg12[%c14_63, %c0_64] : memref<16x32xf32, #tpu.memory_space<vmem>>, vector<2x16xf32>
    tpu.vector_store %arg12[%c14_63, %c0_64], %190 {strides = array<i32>} : memref<16x32xf32, #tpu.memory_space<vmem>>, vector<2x16xf32>,
    %192 = vector.extract_strided_slice %189 {offsets = [0, 16], sizes = [2, 16], strides = [1, 1]} : vector<2x32xf32> to vector<2x16xf32>
    %c0_65 = arith.constant 0 : index
    %c16_66 = arith.constant 16 : index
    %193 = vector.load %arg12[%c0_65, %c16_66] : memref<16x32xf32, #tpu.memory_space<vmem>>, vector<2x16xf32>
    tpu.vector_store %arg12[%c0_65, %c16_66], %192 {strides = array<i32>} : memref<16x32xf32, #tpu.memory_space<vmem>>, vector<2x16xf32>,
    %c0_67 = arith.constant 0 : index
    %c0_68 = arith.constant 0 : index
    %194 = vector.load %arg12[%c0_67, %c0_68] : memref<16x32xf32, #tpu.memory_space<vmem>>, vector<16x32xf32>
    %c0_69 = arith.constant 0 : index
    %c0_70 = arith.constant 0 : index
    %195 = vector.load %arg5[%c0_69, %c0_70] : memref<32x37xf32, #tpu.memory_space<vmem>>, vector<32x37xf32>
    %cst_71 = arith.constant dense<0.000000e+00> : vector<16x37xf32>
    %196 = tpu.matmul %194, %195, %cst_71 {dimension_numbers = #tpu.dot_dimension_numbers<[1], [0], [0], [1], [0, 0, 1, 1], [], []>} : vector<16x32xf32>, vector<32x37xf32>, vector<16x37xf32> -> vector<16x37xf32>
    %c0_72 = arith.constant 0 : index
    %c0_73 = arith.constant 0 : index
    %197 = vector.load %arg1[%c0_72, %c0_73] : memref<16x5xf32, #tpu.memory_space<vmem>>, vector<16x5xf32>
    %c0_74 = arith.constant 0 : index
    %c0_75 = arith.constant 0 : index
    %198 = vector.load %arg6[%c0_74, %c0_75] : memref<5x37xf32, #tpu.memory_space<vmem>>, vector<5x37xf32>
    %cst_76 = arith.constant dense<0.000000e+00> : vector<16x37xf32>
    %199 = tpu.matmul %197, %198, %cst_76 {dimension_numbers = #tpu.dot_dimension_numbers<[1], [0], [0], [1], [0, 0, 1, 1], [], []>} : vector<16x5xf32>, vector<5x37xf32>, vector<16x37xf32> -> vector<16x37xf32>
    %200 = arith.addf %196, %199 : vector<16x37xf32>
    %c0_77 = arith.constant 0 : index
    %c0_78 = arith.constant 0 : index
    %201 = vector.load %arg7[%c0_77, %c0_78] : memref<1x37xf32, #tpu.memory_space<vmem>>, vector<1x37xf32>
    %202 = vector.broadcast %201 : vector<1x37xf32> to vector<16x37xf32>
    %203 = arith.addf %200, %202 : vector<16x37xf32>
    %204 = math.tanh %203 : vector<16x37xf32>
    %c0_79 = arith.constant 0 : index
    %c0_80 = arith.constant 0 : index
    %205 = vector.load %arg8[%c0_79, %c0_80] : memref<37x5xf32, #tpu.memory_space<vmem>>, vector<37x5xf32>
    %cst_81 = arith.constant dense<0.000000e+00> : vector<16x5xf32>
    %206 = tpu.matmul %204, %205, %cst_81 {dimension_numbers = #tpu.dot_dimension_numbers<[1], [0], [0], [1], [0, 0, 1, 1], [], []>} : vector<16x37xf32>, vector<37x5xf32>, vector<16x5xf32> -> vector<16x5xf32>
    %c0_82 = arith.constant 0 : index
    %c0_83 = arith.constant 0 : index
    %207 = vector.load %arg9[%c0_82, %c0_83] : memref<1x5xf32, #tpu.memory_space<vmem>>, vector<1x5xf32>
    %208 = vector.broadcast %207 : vector<1x5xf32> to vector<16x5xf32>
    %209 = arith.addf %206, %208 : vector<16x5xf32>
    %cst_84 = arith.constant dense<0xFF800000> : vector<16xf32>
    %210 = vector.multi_reduction <maximumf>, %209, %cst_84 [1] : vector<16x5xf32> to vector<16xf32>
    %211 = vector.shape_cast %210 : vector<16xf32> to vector<16x1xf32>
    %212 = vector.broadcast %211 : vector<16x1xf32> to vector<16x5xf32>
    %213 = arith.subf %209, %212 : vector<16x5xf32>
    %214 = math.exp %213 : vector<16x5xf32>
    %cst_85 = arith.constant dense<0.000000e+00> : vector<16xf32>
    %215 = vector.multi_reduction <add>, %214, %cst_85 [1] : vector<16x5xf32> to vector<16xf32>
    %216 = vector.shape_cast %215 : vector<16xf32> to vector<16x1xf32>
    %217 = tpu.reciprocal %216 {approx = true} : vector<16x1xf32> -> vector<16x1xf32>
    %218 = vector.broadcast %217 : vector<16x1xf32> to vector<16x5xf32>
    %219 = arith.mulf %214, %218 : vector<16x5xf32>
    %c0_86 = arith.constant 0 : index
    %c0_87 = arith.constant 0 : index
    %220 = vector.load %arg10[%c0_86, %c0_87] : memref<16x5xf32, #tpu.memory_space<vmem>>, vector<16x5xf32>
    tpu.vector_store %arg10[%c0_86, %c0_87], %219 {strides = array<i32>} : memref<16x5xf32, #tpu.memory_space<vmem>>, vector<16x5xf32>,
    return
  }
}

</mosaic_0001>

<llo_original>
// kernel: tpu_custom_call.1
$region0: #{tpu_custom_call.1}
  #allocation0 [shape = 'u32[]', space=smem, size = 0x4, offset = 0x4, fixed_abs, tag = 'smem constant byte address 0x4 - core index']
  #allocation1 [shape = 'u32[144,128]{1,0:T(1,128)}', space=vmem, size = 0x12000, scoped, tag = 'internal scratch']
  #allocation2 [shape = 'f32[16,128]{1,0:T(8,128)}', space=vmem, size = 0x2000, scoped, tag = 'scratch operand']
  #allocation3 [shape = 'f32[16,32]{1,0:T(8,128)}', space=vmem, size = 0x2000, scoped, tag = 'scratch operand']
  %s0 = inlined_call_operand.hbm [shape: f32[16,64], index: 0, kind: input, shape index: {}]
  %s1 = inlined_call_operand.vmem [shape: f32[16,5], index: 1, kind: input, shape index: {}]
  %s2 = inlined_call_operand.vmem [shape: f32[64,128], index: 2, kind: input, shape index: {}]
  %s3 = inlined_call_operand.hbm [shape: f32[32,128], index: 3, kind: input, shape index: {}]
  %s4 = inlined_call_operand.vmem [shape: f32[1,128], index: 4, kind: input, shape index: {}]
  %s5 = inlined_call_operand.hbm [shape: f32[32,37], index: 5, kind: input, shape index: {}]
  %s6 = inlined_call_operand.vmem [shape: f32[5,37], index: 6, kind: input, shape index: {}]
  %s7 = inlined_call_operand.vmem [shape: f32[1,37], index: 7, kind: input, shape index: {}]
  %s8 = inlined_call_operand.vmem [shape: f32[37,5], index: 8, kind: input, shape index: {}]
  %s9 = inlined_call_operand.vmem [shape: f32[1,5], index: 9, kind: input, shape index: {}]
  %s10 = inlined_call_operand.vmem [shape: f32[16,5], index: 10, kind: output, shape index: {}]
  %s11 = sld [smem:[#allocation0]]
  $region62: #{tpu_custom_call.1} parent=0
    _
  %s13 = ssub.s32 1, %s11
  %s14 = scalar_select 0, %s13, %s11
  $region1: #{tpu_custom_call.1} parent=0
    #allocation4 [shape = 'u8[8192]{0}', space=vmem, size = 0x2000, scoped, tag = 'input window, operand 0, single buffered']
    #allocation5 [shape = 's32[1]{0}', space=sflag, size = 0x4, scoped, tag = 'scoped memory for tpu_custom_call.1']
    #allocation6 [shape = 'u8[16384]{0}', space=vmem, size = 0x4000, scoped, tag = 'input window, operand 3, single buffered']
    #allocation7 [shape = 's32[1]{0}', space=sflag, size = 0x4, scoped, tag = 'scoped memory for tpu_custom_call.1']
    #allocation8 [shape = 'u8[16384]{0}', space=vmem, size = 0x4000, scoped, tag = 'input window, operand 5, single buffered']
    %15 = vsyncpa [#allocation5], 0
    %16 = vsyncpa [#allocation7], 0
    // Predicated region
    $region2: #{tpu_custom_call.1} parent=1 // pred_check
      _
    $region3: #{tpu_custom_call.1} parent=1 // pred_check_branch
      %18 = sbr.rel (0) target = $region5
    $region4: #{tpu_custom_call.1} parent=1 // pred_region
      %s20 = ssub.s32 256, 256
      %21 = vsyncadd [#allocation5], %s20
      %s22 = sshll.u32 [#allocation4], 4
      %s23 = int_to_ptr.vmem [resolvable:$true] %s22
      %28 = dma.hbm_to_vmem [thread:$0]  %s0, 256, %s23, [#allocation5], 128, 128, 8
    $region5: #{tpu_custom_call.1} parent=1 // pred_fallthru
      _
    // Predicated region
    $region6: #{tpu_custom_call.1} parent=1 // pred_check
      _
    $region7: #{tpu_custom_call.1} parent=1 // pred_check_branch
      %30 = sbr.rel (0) target = $region9
    $region8: #{tpu_custom_call.1} parent=1 // pred_region
      _
    $region9: #{tpu_custom_call.1} parent=1 // pred_fallthru
      _
    // Predicated region
    $region10: #{tpu_custom_call.1} parent=1 // pred_check
      _
    $region11: #{tpu_custom_call.1} parent=1 // pred_check_branch
      %32 = sbr.rel (0) target = $region13
    $region12: #{tpu_custom_call.1} parent=1 // pred_region
      _
    $region13: #{tpu_custom_call.1} parent=1 // pred_fallthru
      _
    // Predicated region
    $region14: #{tpu_custom_call.1} parent=1 // pred_check
      _
    $region15: #{tpu_custom_call.1} parent=1 // pred_check_branch
      %34 = sbr.rel (0) target = $region17
    $region16: #{tpu_custom_call.1} parent=1 // pred_region
      %s36 = ssub.s32 512, 512
      %37 = vsyncadd [#allocation7], %s36
      %s38 = sshll.u32 [#allocation6], 4
      %s39 = int_to_ptr.vmem [resolvable:$true] %s38
      %44 = dma.hbm_to_vmem [thread:$0]  %s3, 512, %s39, [#allocation7], 128, 128, 8
    $region17: #{tpu_custom_call.1} parent=1 // pred_fallthru
      _
    // Predicated region
    $region18: #{tpu_custom_call.1} parent=1 // pred_check
      _
    $region19: #{tpu_custom_call.1} parent=1 // pred_check_branch
      %46 = sbr.rel (0) target = $region21
    $region20: #{tpu_custom_call.1} parent=1 // pred_region
      _
    $region21: #{tpu_custom_call.1} parent=1 // pred_fallthru
      _
    // Predicated region
    $region22: #{tpu_custom_call.1} parent=1 // pred_check
      _
    $region23: #{tpu_custom_call.1} parent=1 // pred_check_branch
      %48 = sbr.rel (0) target = $region25
    $region24: #{tpu_custom_call.1} parent=1 // pred_region
      %s50 = ssub.s32 512, 512
      %51 = vsyncadd [#allocation7], %s50
      %s52 = sshll.u32 [#allocation8], 4
      %s53 = int_to_ptr.vmem [resolvable:$true] %s52
      %58 = dma.hbm_to_vmem [thread:$0]  %s5, 512, %s53, [#allocation7], 128, 128, 8
    $region25: #{tpu_custom_call.1} parent=1 // pred_fallthru
      _
    // Predicated region
    $region26: #{tpu_custom_call.1} parent=1 // pred_check
      _
    $region27: #{tpu_custom_call.1} parent=1 // pred_check_branch
      %60 = sbr.rel (0) target = $region29
    $region28: #{tpu_custom_call.1} parent=1 // pred_region
      _
    $region29: #{tpu_custom_call.1} parent=1 // pred_fallthru
      _
    // Predicated region
    $region30: #{tpu_custom_call.1} parent=1 // pred_check
      _
    $region31: #{tpu_custom_call.1} parent=1 // pred_check_branch
      %62 = sbr.rel (0) target = $region33
    $region32: #{tpu_custom_call.1} parent=1 // pred_region
      _
    $region33: #{tpu_custom_call.1} parent=1 // pred_fallthru
      _
    // Predicated region
    $region34: #{tpu_custom_call.1} parent=1 // pred_check
      _
    $region35: #{tpu_custom_call.1} parent=1 // pred_check_branch
      %64 = sbr.rel (0) target = $region37
    $region36: #{tpu_custom_call.1} parent=1 // pred_region
      _
    $region37: #{tpu_custom_call.1} parent=1 // pred_fallthru
      _
    // Predicated region
    $region38: #{tpu_custom_call.1} parent=1 // pred_check
      _
    $region39: #{tpu_custom_call.1} parent=1 // pred_check_branch
      %66 = sbr.rel (0) target = $region41
    $region40: #{tpu_custom_call.1} parent=1 // pred_region
      _
    $region41: #{tpu_custom_call.1} parent=1 // pred_fallthru
      _
    // Predicated region
    $region42: #{tpu_custom_call.1} parent=1 // pred_check
      _
    $region43: #{tpu_custom_call.1} parent=1 // pred_check_branch
      %68 = sbr.rel (0) target = $region45
    $region44: #{tpu_custom_call.1} parent=1 // pred_region
      %69 = dma.done [#allocation5], 256
    $region45: #{tpu_custom_call.1} parent=1 // pred_fallthru
      _
    // Predicated region
    $region46: #{tpu_custom_call.1} parent=1 // pred_check
      _
    $region47: #{tpu_custom_call.1} parent=1 // pred_check_branch
      %71 = sbr.rel (0) target = $region49
    $region48: #{tpu_custom_call.1} parent=1 // pred_region
      %72 = dma.done [#allocation7], 512
    $region49: #{tpu_custom_call.1} parent=1 // pred_fallthru
      _
    // Predicated region
    $region50: #{tpu_custom_call.1} parent=1 // pred_check
      _
    $region51: #{tpu_custom_call.1} parent=1 // pred_check_branch
      %74 = sbr.rel (0) target = $region53
    $region52: #{tpu_custom_call.1} parent=1 // pred_region
      %75 = dma.done [#allocation7], 512
    $region53: #{tpu_custom_call.1} parent=1 // pred_fallthru
      _
    %v76 = vld [vmem:[#allocation4] sm:$0xff]
    %v77 = vld [vmem:[#allocation4 + $0x8] sm:$0xff]
    %v78 = vld [vmem:[%s2] sm:$0xff]
    %v79 = vld [vmem:[%s2 + $0x8] sm:$0xff]
    %v80 = vld [vmem:[%s2 + $0x10] sm:$0xff]
    %v81 = vld [vmem:[%s2 + $0x18] sm:$0xff]
    %v82 = vld [vmem:[%s2 + $0x20] sm:$0xff]
    %v83 = vld [vmem:[%s2 + $0x28] sm:$0xff]
    %v84 = vld [vmem:[%s2 + $0x30] sm:$0xff]
    %v85 = vld [vmem:[%s2 + $0x38] sm:$0xff]
    %v86 = vld [vmem:[%s4] sm:$0x1]
    %v88 = vlaneseq
    %v89 = vshrl.u32 %v88, 7
    %v90 = vsub.s32 0, %v89
    %v91 = vrot.slane %v86, %v90
    %vm93 = vcmask 523264
    %v95 = vsel %vm93, %v76, 0
    %v98 = vsel %vm93, %v77, 0
    %100 = vmatprep.subr.mxu0 0.0
    %101 = vmatpush1.msra.mxu0 %v78
    %102 = vmatprep.subr.mxu0 0.0
    %103 = vmatpush1.msra.mxu0 %v79
    %104 = vmatprep.subr.mxu0 0.0
    %105 = vmatpush1.msra.mxu0 %v80
    %106 = vmatprep.subr.mxu0 0.0
    %107 = vmatpush1.msra.mxu0 %v81
    %108 = vmatprep.subr.mxu0 0.0
    %109 = vmatpush1.msra.mxu0 %v82
    %110 = vmatprep.subr.mxu0 0.0
    %111 = vmatpush1.msra.mxu0 %v83
    %112 = vmatprep.subr.mxu0 0.0
    %113 = vmatpush1.msra.mxu0 %v84
    %114 = vmatprep.subr.mxu0 0.0
    %115 = vmatpush1.msra.mxu0 %v85
    %116 = vmatprep.subr.mxu0 0.0
    %117 = vmatpush1.msra.mxu0 0.0
    %118 = vmatprep.subr.mxu0 0.0
    %119 = vmatpush1.msra.mxu0 0.0
    %120 = vmatprep.subr.mxu0 0.0
    %121 = vmatpush1.msra.mxu0 0.0
    %122 = vmatprep.subr.mxu0 0.0
    %123 = vmatpush1.msra.mxu0 0.0
    %124 = vmatprep.subr.mxu0 0.0
    %125 = vmatpush1.msra.mxu0 0.0
    %126 = vmatprep.subr.mxu0 0.0
    %127 = vmatpush1.msra.mxu0 0.0
    %128 = vmatprep.subr.mxu0 0.0
    %129 = vmatpush1.msra.mxu0 0.0
    %130 = vmatprep.subr.mxu0 0.0
    %131 = vmatpush1.msra.mxu0 0.0
    %132 = vmatprep.subr.mxu0 0.0
    %133 = vmatpush1.msra.mxu0 0.0
    %134 = vmatprep.subr.mxu0 0.0
    %135 = vmatpush1.msra.mxu0 0.0
    %136 = vmatprep.subr.mxu0 0.0
    %137 = vmatpush1.msra.mxu0 0.0
    %138 = vmatprep.subr.mxu0 0.0
    %139 = vmatpush1.msra.mxu0 0.0
    %140 = vmatprep.subr.mxu0 0.0
    %141 = vmatpush1.msra.mxu0 0.0
    %142 = vmatprep.subr.mxu0 0.0
    %143 = vmatpush1.msra.mxu0 0.0
    %144 = vmatprep.subr.mxu0 0.0
    %145 = vmatpush1.msra.mxu0 0.0
    %146 = vmatprep.subr.mxu0 0.0
    %147 = vmatpush1.msra.mxu0 0.0
    %148 = vmatprep.subr.mxu0 0.0
    %149 = vmatpush1.msra.mxu0 0.0
    %150 = vmatprep.subr.mxu0 0.0
    %151 = vmatpush1.msra.mxu0 0.0
    %152 = vmatprep.subr.mxu0 0.0
    %153 = vmatpush1.msra.mxu0 0.0
    %154 = vmatprep.subr.mxu0 0.0
    %155 = vmatpush1.msra.mxu0 0.0
    %156 = vmatprep.subr.mxu0 0.0
    %157 = vmatpush1.msra.mxu0 0.0
    %158 = vmatprep.subr.mxu0 0.0
    %159 = vmatpush1.msra.mxu0 0.0
    %160 = vmatprep.subr.mxu0 0.0
    %161 = vmatpush1.msra.mxu0 0.0
    %162 = vmatprep.subr.mxu0 0.0
    %163 = vmatpush1.msra.mxu0 0.0
    %164 = vmatprep.mubr.f32.mxu0 0.0
    %165 = vmatmul.mubr.f32.gmra.mrb[0].mxu0 %v95
    %v166 = vpop.f32.mrb[0].mxu0
    %v167 = vadd.f32 %v91, %v166
    %v168 = vpop.f32.mrb[0].mxu0
    %169 = vmatprep.mubr.f32.mxu0 0.0
    %170 = vmatmul.mubr.f32.gmra.mrb[0].mxu0 %v98
    %v171 = vpop.f32.mrb[0].mxu0
    %v172 = vadd.f32 %v91, %v171
    %v173 = vpop.f32.mrb[0].mxu0
    %174 = vdwg.mxu0
    %175 = vst [vmem:[#allocation2] sm:$0xff] %v167
    %176 = vst [vmem:[#allocation2 + $0x8] sm:$0xff] %v172
    %v177 = vld [vmem:[#allocation6] sm:$0xff]
    %v178 = vld [vmem:[#allocation6 + $0x8] sm:$0xff]
    %v179 = vld [vmem:[#allocation6 + $0x10] sm:$0xff]
    %v180 = vld [vmem:[#allocation6 + $0x18] sm:$0xff]
    %v181 = vld [vmem:[#allocation2] sm:$0x3]
    %vm182 = vcmask 261120
    %v184 = vsel %vm182, 0.0, 0
    %186 = vmatprep.subr.mxu0 0.0
    %187 = vmatpush1.msra.mxu0 %v177
    %188 = vmatprep.subr.mxu0 0.0
    %189 = vmatpush1.msra.mxu0 %v178
    %190 = vmatprep.subr.mxu0 0.0
    %191 = vmatpush1.msra.mxu0 %v179
    %192 = vmatprep.subr.mxu0 0.0
    %193 = vmatpush1.msra.mxu0 %v180
    %194 = vmatprep.subr.mxu0 0.0
    %195 = vmatpush1.msra.mxu0 0.0
    %196 = vmatprep.subr.mxu0 0.0
    %197 = vmatpush1.msra.mxu0 0.0
    %198 = vmatprep.subr.mxu0 0.0
    %199 = vmatpush1.msra.mxu0 0.0
    %200 = vmatprep.subr.mxu0 0.0
    %201 = vmatpush1.msra.mxu0 0.0
    %202 = vmatprep.subr.mxu0 0.0
    %203 = vmatpush1.msra.mxu0 0.0
    %204 = vmatprep.subr.mxu0 0.0
    %205 = vmatpush1.msra.mxu0 0.0
    %206 = vmatprep.subr.mxu0 0.0
    %207 = vmatpush1.msra.mxu0 0.0
    %208 = vmatprep.subr.mxu0 0.0
    %209 = vmatpush1.msra.mxu0 0.0
    %210 = vmatprep.subr.mxu0 0.0
    %211 = vmatpush1.msra.mxu0 0.0
    %212 = vmatprep.subr.mxu0 0.0
    %213 = vmatpush1.msra.mxu0 0.0
    %214 = vmatprep.subr.mxu0 0.0
    %215 = vmatpush1.msra.mxu0 0.0
    %216 = vmatprep.subr.mxu0 0.0
    %217 = vmatpush1.msra.mxu0 0.0
    %218 = vmatprep.subr.mxu0 0.0
    %219 = vmatpush1.msra.mxu0 0.0
    %220 = vmatprep.subr.mxu0 0.0
    %221 = vmatpush1.msra.mxu0 0.0
    %222 = vmatprep.subr.mxu0 0.0
    %223 = vmatpush1.msra.mxu0 0.0
    %224 = vmatprep.subr.mxu0 0.0
    %225 = vmatpush1.msra.mxu0 0.0
    %226 = vmatprep.subr.mxu0 0.0
    %227 = vmatpush1.msra.mxu0 0.0
    %228 = vmatprep.subr.mxu0 0.0
    %229 = vmatpush1.msra.mxu0 0.0
    %230 = vmatprep.subr.mxu0 0.0
    %231 = vmatpush1.msra.mxu0 0.0
    %232 = vmatprep.subr.mxu0 0.0
    %233 = vmatpush1.msra.mxu0 0.0
    %234 = vmatprep.subr.mxu0 0.0
    %235 = vmatpush1.msra.mxu0 0.0
    %236 = vmatprep.subr.mxu0 0.0
    %237 = vmatpush1.msra.mxu0 0.0
    %238 = vmatprep.subr.mxu0 0.0
    %239 = vmatpush1.msra.mxu0 0.0
    %240 = vmatprep.subr.mxu0 0.0
    %241 = vmatpush1.msra.mxu0 0.0
    %242 = vmatprep.subr.mxu0 0.0
    %243 = vmatpush1.msra.mxu0 0.0
    %244 = vmatprep.subr.mxu0 0.0
    %245 = vmatpush1.msra.mxu0 0.0
    %246 = vmatprep.subr.mxu0 0.0
    %247 = vmatpush1.msra.mxu0 0.0
    %248 = vmatprep.subr.mxu0 0.0
    %249 = vmatpush1.msra.mxu0 0.0
    %250 = vmatprep.mubr.f32.mxu0 0.0
    %251 = vmatmul.mubr.f32.gmra.mrb[0].mxu0 %v184
    %v252 = vpop.f32.mrb[0].mxu0
    %v253 = vadd.f32 0.0, %v252
    %v254 = vpop.f32.mrb[0].mxu0
    %255 = vdwg.mxu0
    %v256 = vadd.f32 %v181, %v253
    %v257 = vxor.u32 %v256, 2147483648
    %v258 = vmul.f32 %v257, 1.442695
    %v259 = vpow.pop %v258
    %v260 = vadd.f32 %v259, 1.0
    %v261 = vrcp.pop %v260
    %v262 = vmul.f32 1.0, %v261
    %v263 = vtanh.pop %v256
    %v264 = vmul.f32 %v262, 0.0
    %266 = vrot.lane.b32.xlu0 %v263, 32
    %v267 = vpop.permute.xlu0 %266
    %v269 = vmul.f32 %v262, %v267
    %271 = vrot.lane.b32.xlu0 %v269, 32
    %v272 = vpop.permute.xlu0 %271
    %v274 = vadd.f32 %v264, %v272
    %v275 = vtanh.pop %v274
    %277 = vrot.lane.b32.xlu0 %v275, 32
    %v278 = vpop.permute.xlu0 %277
    %v280 = vmul.f32 %v262, %v278
    %282 = vrot.lane.b32.xlu0 %v280, 64
    %v283 = vpop.permute.xlu0 %282
    %vm285 = vcmask 123904
    %286 = vst.msk [vmem:[#allocation3] sm:$0x3] %vm285, %v283
    %vm287 = vcmask 255104
    %288 = vst.msk [vmem:[#allocation3 + $0xe] sm:$0x3] %vm287, %v283
    %v289 = vld [vmem:[#allocation2 + $0x2] sm:$0x3]
    %v290 = vsel %vm182, %v283, 0
    %292 = vmatprep.subr.mxu0 0.0
    %293 = vmatpush1.msra.mxu0 %v177
    %294 = vmatprep.subr.mxu0 0.0
    %295 = vmatpush1.msra.mxu0 %v178
    %296 = vmatprep.subr.mxu0 0.0
    %297 = vmatpush1.msra.mxu0 %v179
    %298 = vmatprep.subr.mxu0 0.0
    %299 = vmatpush1.msra.mxu0 %v180
    %300 = vmatprep.subr.mxu0 0.0
    %301 = vmatpush1.msra.mxu0 0.0
    %302 = vmatprep.subr.mxu0 0.0
    %303 = vmatpush1.msra.mxu0 0.0
    %304 = vmatprep.subr.mxu0 0.0
    %305 = vmatpush1.msra.mxu0 0.0
    %306 = vmatprep.subr.mxu0 0.0
    %307 = vmatpush1.msra.mxu0 0.0
    %308 = vmatprep.subr.mxu0 0.0
    %309 = vmatpush1.msra.mxu0 0.0
    %310 = vmatprep.subr.mxu0 0.0
    %311 = vmatpush1.msra.mxu0 0.0
    %312 = vmatprep.subr.mxu0 0.0
    %313 = vmatpush1.msra.mxu0 0.0
    %314 = vmatprep.subr.mxu0 0.0
    %315 = vmatpush1.msra.mxu0 0.0
    %316 = vmatprep.subr.mxu0 0.0
    %317 = vmatpush1.msra.mxu0 0.0
    %318 = vmatprep.subr.mxu0 0.0
    %319 = vmatpush1.msra.mxu0 0.0
    %320 = vmatprep.subr.mxu0 0.0
    %321 = vmatpush1.msra.mxu0 0.0
    %322 = vmatprep.subr.mxu0 0.0
    %323 = vmatpush1.msra.mxu0 0.0
    %324 = vmatprep.subr.mxu0 0.0
    %325 = vmatpush1.msra.mxu0 0.0
    %326 = vmatprep.subr.mxu0 0.0
    %327 = vmatpush1.msra.mxu0 0.0
    %328 = vmatprep.subr.mxu0 0.0
    %329 = vmatpush1.msra.mxu0 0.0
    %330 = vmatprep.subr.mxu0 0.0
    %331 = vmatpush1.msra.mxu0 0.0
    %332 = vmatprep.subr.mxu0 0.0
    %333 = vmatpush1.msra.mxu0 0.0
    %334 = vmatprep.subr.mxu0 0.0
    %335 = vmatpush1.msra.mxu0 0.0
    %336 = vmatprep.subr.mxu0 0.0
    %337 = vmatpush1.msra.mxu0 0.0
    %338 = vmatprep.subr.mxu0 0.0
    %339 = vmatpush1.msra.mxu0 0.0
    %340 = vmatprep.subr.mxu0 0.0
    %341 = vmatpush1.msra.mxu0 0.0
    %342 = vmatprep.subr.mxu0 0.0
    %343 = vmatpush1.msra.mxu0 0.0
    %344 = vmatprep.subr.mxu0 0.0
    %345 = vmatpush1.msra.mxu0 0.0
    %346 = vmatprep.subr.mxu0 0.0
    %347 = vmatpush1.msra.mxu0 0.0
    %348 = vmatprep.subr.mxu0 0.0
    %349 = vmatpush1.msra.mxu0 0.0
    %350 = vmatprep.subr.mxu0 0.0
    %351 = vmatpush1.msra.mxu0 0.0
    %352 = vmatprep.subr.mxu0 0.0
    %353 = vmatpush1.msra.mxu0 0.0
    %354 = vmatprep.subr.mxu0 0.0
    %355 = vmatpush1.msra.mxu0 0.0
    %356 = vmatprep.mubr.f32.mxu0 0.0
    %357 = vmatmul.mubr.f32.gmra.mrb[0].mxu0 %v290
    %v358 = vpop.f32.mrb[0].mxu0
    %v359 = vadd.f32 0.0, %v358
    %v360 = vpop.f32.mrb[0].mxu0
    %361 = vdwg.mxu0
    %v362 = vadd.f32 %v289, %v359
    %v363 = vxor.u32 %v362, 2147483648
    %v364 = vmul.f32 %v363, 1.442695
    %v365 = vpow.pop %v364
    %v366 = vadd.f32 %v365, 1.0
    %v367 = vrcp.pop %v366
    %v368 = vmul.f32 1.0, %v367
    %v369 = vtanh.pop %v362
    %v370 = vmul.f32 %v368, %v274
    %372 = vrot.lane.b32.xlu0 %v369, 32
    %v373 = vpop.permute.xlu0 %372
    %v375 = vmul.f32 %v368, %v373
    %377 = vrot.lane.b32.xlu0 %v375, 32
    %v378 = vpop.permute.xlu0 %377
    %v380 = vadd.f32 %v370, %v378
    %v381 = vtanh.pop %v380
    %383 = vrot.lane.b32.xlu0 %v381, 32
    %v384 = vpop.permute.xlu0 %383
    %v386 = vmul.f32 %v368, %v384
    %388 = vrot.lane.b32.xlu0 %v386, 64
    %v389 = vpop.permute.xlu0 %388
    %391 = vst.msk [vmem:[#allocation3 + $0x2] sm:$0x3] %vm285, %v389
    %392 = vst.msk [vmem:[#allocation3 + $0xc] sm:$0x3] %vm287, %v389
    %v393 = vld [vmem:[#allocation2 + $0x4] sm:$0x3]
    %v394 = vsel %vm182, %v389, 0
    %396 = vmatprep.subr.mxu0 0.0
    %397 = vmatpush1.msra.mxu0 %v177
    %398 = vmatprep.subr.mxu0 0.0
    %399 = vmatpush1.msra.mxu0 %v178
    %400 = vmatprep.subr.mxu0 0.0
    %401 = vmatpush1.msra.mxu0 %v179
    %402 = vmatprep.subr.mxu0 0.0
    %403 = vmatpush1.msra.mxu0 %v180
    %404 = vmatprep.subr.mxu0 0.0
    %405 = vmatpush1.msra.mxu0 0.0
    %406 = vmatprep.subr.mxu0 0.0
    %407 = vmatpush1.msra.mxu0 0.0
    %408 = vmatprep.subr.mxu0 0.0
    %409 = vmatpush1.msra.mxu0 0.0
    %410 = vmatprep.subr.mxu0 0.0
    %411 = vmatpush1.msra.mxu0 0.0
    %412 = vmatprep.subr.mxu0 0.0
    %413 = vmatpush1.msra.mxu0 0.0
    %414 = vmatprep.subr.mxu0 0.0
    %415 = vmatpush1.msra.mxu0 0.0
    %416 = vmatprep.subr.mxu0 0.0
    %417 = vmatpush1.msra.mxu0 0.0
    %418 = vmatprep.subr.mxu0 0.0
    %419 = vmatpush1.msra.mxu0 0.0
    %420 = vmatprep.subr.mxu0 0.0
    %421 = vmatpush1.msra.mxu0 0.0
    %422 = vmatprep.subr.mxu0 0.0
    %423 = vmatpush1.msra.mxu0 0.0
    %424 = vmatprep.subr.mxu0 0.0
    %425 = vmatpush1.msra.mxu0 0.0
    %426 = vmatprep.subr.mxu0 0.0
    %427 = vmatpush1.msra.mxu0 0.0
    %428 = vmatprep.subr.mxu0 0.0
    %429 = vmatpush1.msra.mxu0 0.0
    %430 = vmatprep.subr.mxu0 0.0
    %431 = vmatpush1.msra.mxu0 0.0
    %432 = vmatprep.subr.mxu0 0.0
    %433 = vmatpush1.msra.mxu0 0.0
    %434 = vmatprep.subr.mxu0 0.0
    %435 = vmatpush1.msra.mxu0 0.0
    %436 = vmatprep.subr.mxu0 0.0
    %437 = vmatpush1.msra.mxu0 0.0
    %438 = vmatprep.subr.mxu0 0.0
    %439 = vmatpush1.msra.mxu0 0.0
    %440 = vmatprep.subr.mxu0 0.0
    %441 = vmatpush1.msra.mxu0 0.0
    %442 = vmatprep.subr.mxu0 0.0
    %443 = vmatpush1.msra.mxu0 0.0
    %444 = vmatprep.subr.mxu0 0.0
    %445 = vmatpush1.msra.mxu0 0.0
    %446 = vmatprep.subr.mxu0 0.0
    %447 = vmatpush1.msra.mxu0 0.0
    %448 = vmatprep.subr.mxu0 0.0
    %449 = vmatpush1.msra.mxu0 0.0
    %450 = vmatprep.subr.mxu0 0.0
    %451 = vmatpush1.msra.mxu0 0.0
    %452 = vmatprep.subr.mxu0 0.0
    %453 = vmatpush1.msra.mxu0 0.0
    %454 = vmatprep.subr.mxu0 0.0
    %455 = vmatpush1.msra.mxu0 0.0
    %456 = vmatprep.subr.mxu0 0.0
    %457 = vmatpush1.msra.mxu0 0.0
    %458 = vmatprep.subr.mxu0 0.0
    %459 = vmatpush1.msra.mxu0 0.0
    %460 = vmatprep.mubr.f32.mxu0 0.0
    %461 = vmatmul.mubr.f32.gmra.mrb[0].mxu0 %v394
    %v462 = vpop.f32.mrb[0].mxu0
    %v463 = vadd.f32 0.0, %v462
    %v464 = vpop.f32.mrb[0].mxu0
    %465 = vdwg.mxu0
    %v466 = vadd.f32 %v393, %v463
    %v467 = vxor.u32 %v466, 2147483648
    %v468 = vmul.f32 %v467, 1.442695
    %v469 = vpow.pop %v468
    %v470 = vadd.f32 %v469, 1.0
    %v471 = vrcp.pop %v470
    %v472 = vmul.f32 1.0, %v471
    %v473 = vtanh.pop %v466
    %v474 = vmul.f32 %v472, %v380
    %476 = vrot.lane.b32.xlu0 %v473, 32
    %v477 = vpop.permute.xlu0 %476
    %v479 = vmul.f32 %v472, %v477
    %481 = vrot.lane.b32.xlu0 %v479, 32
    %v482 = vpop.permute.xlu0 %481
    %v484 = vadd.f32 %v474, %v482
    %v485 = vtanh.pop %v484
    %487 = vrot.lane.b32.xlu0 %v485, 32
    %v488 = vpop.permute.xlu0 %487
    %v490 = vmul.f32 %v472, %v488
    %492 = vrot.lane.b32.xlu0 %v490, 64
    %v493 = vpop.permute.xlu0 %492
    %495 = vst.msk [vmem:[#allocation3 + $0x4] sm:$0x3] %vm285, %v493
    %496 = vst.msk [vmem:[#allocation3 + $0xa] sm:$0x3] %vm287, %v493
    %v497 = vld [vmem:[#allocation2 + $0x6] sm:$0x3]
    %v498 = vsel %vm182, %v493, 0
    %500 = vmatprep.subr.mxu0 0.0
    %501 = vmatpush1.msra.mxu0 %v177
    %502 = vmatprep.subr.mxu0 0.0
    %503 = vmatpush1.msra.mxu0 %v178
    %504 = vmatprep.subr.mxu0 0.0
    %505 = vmatpush1.msra.mxu0 %v179
    %506 = vmatprep.subr.mxu0 0.0
    %507 = vmatpush1.msra.mxu0 %v180
    %508 = vmatprep.subr.mxu0 0.0
    %509 = vmatpush1.msra.mxu0 0.0
    %510 = vmatprep.subr.mxu0 0.0
    %511 = vmatpush1.msra.mxu0 0.0
    %512 = vmatprep.subr.mxu0 0.0
    %513 = vmatpush1.msra.mxu0 0.0
    %514 = vmatprep.subr.mxu0 0.0
    %515 = vmatpush1.msra.mxu0 0.0
    %516 = vmatprep.subr.mxu0 0.0
    %517 = vmatpush1.msra.mxu0 0.0
    %518 = vmatprep.subr.mxu0 0.0
    %519 = vmatpush1.msra.mxu0 0.0
    %520 = vmatprep.subr.mxu0 0.0
    %521 = vmatpush1.msra.mxu0 0.0
    %522 = vmatprep.subr.mxu0 0.0
    %523 = vmatpush1.msra.mxu0 0.0
    %524 = vmatprep.subr.mxu0 0.0
    %525 = vmatpush1.msra.mxu0 0.0
    %526 = vmatprep.subr.mxu0 0.0
    %527 = vmatpush1.msra.mxu0 0.0
    %528 = vmatprep.subr.mxu0 0.0
    %529 = vmatpush1.msra.mxu0 0.0
    %530 = vmatprep.subr.mxu0 0.0
    %531 = vmatpush1.msra.mxu0 0.0
    %532 = vmatprep.subr.mxu0 0.0
    %533 = vmatpush1.msra.mxu0 0.0
    %534 = vmatprep.subr.mxu0 0.0
    %535 = vmatpush1.msra.mxu0 0.0
    %536 = vmatprep.subr.mxu0 0.0
    %537 = vmatpush1.msra.mxu0 0.0
    %538 = vmatprep.subr.mxu0 0.0
    %539 = vmatpush1.msra.mxu0 0.0
    %540 = vmatprep.subr.mxu0 0.0
    %541 = vmatpush1.msra.mxu0 0.0
    %542 = vmatprep.subr.mxu0 0.0
    %543 = vmatpush1.msra.mxu0 0.0
    %544 = vmatprep.subr.mxu0 0.0
    %545 = vmatpush1.msra.mxu0 0.0
    %546 = vmatprep.subr.mxu0 0.0
    %547 = vmatpush1.msra.mxu0 0.0
    %548 = vmatprep.subr.mxu0 0.0
    %549 = vmatpush1.msra.mxu0 0.0
    %550 = vmatprep.subr.mxu0 0.0
    %551 = vmatpush1.msra.mxu0 0.0
    %552 = vmatprep.subr.mxu0 0.0
    %553 = vmatpush1.msra.mxu0 0.0
    %554 = vmatprep.subr.mxu0 0.0
    %555 = vmatpush1.msra.mxu0 0.0
    %556 = vmatprep.subr.mxu0 0.0
    %557 = vmatpush1.msra.mxu0 0.0
    %558 = vmatprep.subr.mxu0 0.0
    %559 = vmatpush1.msra.mxu0 0.0
    %560 = vmatprep.subr.mxu0 0.0
    %561 = vmatpush1.msra.mxu0 0.0
    %562 = vmatprep.subr.mxu0 0.0
    %563 = vmatpush1.msra.mxu0 0.0
    %564 = vmatprep.mubr.f32.mxu0 0.0
    %565 = vmatmul.mubr.f32.gmra.mrb[0].mxu0 %v498
    %v566 = vpop.f32.mrb[0].mxu0
    %v567 = vadd.f32 0.0, %v566
    %v568 = vpop.f32.mrb[0].mxu0
    %569 = vdwg.mxu0
    %v570 = vadd.f32 %v497, %v567
    %v571 = vxor.u32 %v570, 2147483648
    %v572 = vmul.f32 %v571, 1.442695
    %v573 = vpow.pop %v572
    %v574 = vadd.f32 %v573, 1.0
    %v575 = vrcp.pop %v574
    %v576 = vmul.f32 1.0, %v575
    %v577 = vtanh.pop %v570
    %v578 = vmul.f32 %v576, %v484
    %580 = vrot.lane.b32.xlu0 %v577, 32
    %v581 = vpop.permute.xlu0 %580
    %v583 = vmul.f32 %v576, %v581
    %585 = vrot.lane.b32.xlu0 %v583, 32
    %v586 = vpop.permute.xlu0 %585
    %v588 = vadd.f32 %v578, %v586
    %v589 = vtanh.pop %v588
    %591 = vrot.lane.b32.xlu0 %v589, 32
    %v592 = vpop.permute.xlu0 %591
    %v594 = vmul.f32 %v576, %v592
    %596 = vrot.lane.b32.xlu0 %v594, 64
    %v597 = vpop.permute.xlu0 %596
    %599 = vst.msk [vmem:[#allocation3 + $0x6] sm:$0x3] %vm285, %v597
    %600 = vst.msk [vmem:[#allocation3 + $0x8] sm:$0x3] %vm287, %v597
    %v601 = vld [vmem:[#allocation2 + $0x8] sm:$0x3]
    %v602 = vsel %vm182, %v597, 0
    %604 = vmatprep.subr.mxu0 0.0
    %605 = vmatpush1.msra.mxu0 %v177
    %606 = vmatprep.subr.mxu0 0.0
    %607 = vmatpush1.msra.mxu0 %v178
    %608 = vmatprep.subr.mxu0 0.0
    %609 = vmatpush1.msra.mxu0 %v179
    %610 = vmatprep.subr.mxu0 0.0
    %611 = vmatpush1.msra.mxu0 %v180
    %612 = vmatprep.subr.mxu0 0.0
    %613 = vmatpush1.msra.mxu0 0.0
    %614 = vmatprep.subr.mxu0 0.0
    %615 = vmatpush1.msra.mxu0 0.0
    %616 = vmatprep.subr.mxu0 0.0
    %617 = vmatpush1.msra.mxu0 0.0
    %618 = vmatprep.subr.mxu0 0.0
    %619 = vmatpush1.msra.mxu0 0.0
    %620 = vmatprep.subr.mxu0 0.0
    %621 = vmatpush1.msra.mxu0 0.0
    %622 = vmatprep.subr.mxu0 0.0
    %623 = vmatpush1.msra.mxu0 0.0
    %624 = vmatprep.subr.mxu0 0.0
    %625 = vmatpush1.msra.mxu0 0.0
    %626 = vmatprep.subr.mxu0 0.0
    %627 = vmatpush1.msra.mxu0 0.0
    %628 = vmatprep.subr.mxu0 0.0
    %629 = vmatpush1.msra.mxu0 0.0
    %630 = vmatprep.subr.mxu0 0.0
    %631 = vmatpush1.msra.mxu0 0.0
    %632 = vmatprep.subr.mxu0 0.0
    %633 = vmatpush1.msra.mxu0 0.0
    %634 = vmatprep.subr.mxu0 0.0
    %635 = vmatpush1.msra.mxu0 0.0
    %636 = vmatprep.subr.mxu0 0.0
    %637 = vmatpush1.msra.mxu0 0.0
    %638 = vmatprep.subr.mxu0 0.0
    %639 = vmatpush1.msra.mxu0 0.0
    %640 = vmatprep.subr.mxu0 0.0
    %641 = vmatpush1.msra.mxu0 0.0
    %642 = vmatprep.subr.mxu0 0.0
    %643 = vmatpush1.msra.mxu0 0.0
    %644 = vmatprep.subr.mxu0 0.0
    %645 = vmatpush1.msra.mxu0 0.0
    %646 = vmatprep.subr.mxu0 0.0
    %647 = vmatpush1.msra.mxu0 0.0
    %648 = vmatprep.subr.mxu0 0.0
    %649 = vmatpush1.msra.mxu0 0.0
    %650 = vmatprep.subr.mxu0 0.0
    %651 = vmatpush1.msra.mxu0 0.0
    %652 = vmatprep.subr.mxu0 0.0
    %653 = vmatpush1.msra.mxu0 0.0
    %654 = vmatprep.subr.mxu0 0.0
    %655 = vmatpush1.msra.mxu0 0.0
    %656 = vmatprep.subr.mxu0 0.0
    %657 = vmatpush1.msra.mxu0 0.0
    %658 = vmatprep.subr.mxu0 0.0
    %659 = vmatpush1.msra.mxu0 0.0
    %660 = vmatprep.subr.mxu0 0.0
    %661 = vmatpush1.msra.mxu0 0.0
    %662 = vmatprep.subr.mxu0 0.0
    %663 = vmatpush1.msra.mxu0 0.0
    %664 = vmatprep.subr.mxu0 0.0
    %665 = vmatpush1.msra.mxu0 0.0
    %666 = vmatprep.subr.mxu0 0.0
    %667 = vmatpush1.msra.mxu0 0.0
    %668 = vmatprep.mubr.f32.mxu0 0.0
    %669 = vmatmul.mubr.f32.gmra.mrb[0].mxu0 %v602
    %v670 = vpop.f32.mrb[0].mxu0
    %v671 = vadd.f32 0.0, %v670
    %v672 = vpop.f32.mrb[0].mxu0
    %673 = vdwg.mxu0
    %v674 = vadd.f32 %v601, %v671
    %v675 = vxor.u32 %v674, 2147483648
    %v676 = vmul.f32 %v675, 1.442695
    %v677 = vpow.pop %v676
    %v678 = vadd.f32 %v677, 1.0
    %v679 = vrcp.pop %v678
    %v680 = vmul.f32 1.0, %v679
    %v681 = vtanh.pop %v674
    %v682 = vmul.f32 %v680, %v588
    %684 = vrot.lane.b32.xlu0 %v681, 32
    %v685 = vpop.permute.xlu0 %684
    %v687 = vmul.f32 %v680, %v685
    %689 = vrot.lane.b32.xlu0 %v687, 32
    %v690 = vpop.permute.xlu0 %689
    %v692 = vadd.f32 %v682, %v690
    %v693 = vtanh.pop %v692
    %695 = vrot.lane.b32.xlu0 %v693, 32
    %v696 = vpop.permute.xlu0 %695
    %v698 = vmul.f32 %v680, %v696
    %700 = vrot.lane.b32.xlu0 %v698, 64
    %v701 = vpop.permute.xlu0 %700
    %703 = vst.msk [vmem:[#allocation3 + $0x8] sm:$0x3] %vm285, %v701
    %704 = vst.msk [vmem:[#allocation3 + $0x6] sm:$0x3] %vm287, %v701
    %v705 = vld [vmem:[#allocation2 + $0xa] sm:$0x3]
    %v706 = vsel %vm182, %v701, 0
    %708 = vmatprep.subr.mxu0 0.0
    %709 = vmatpush1.msra.mxu0 %v177
    %710 = vmatprep.subr.mxu0 0.0
    %711 = vmatpush1.msra.mxu0 %v178
    %712 = vmatprep.subr.mxu0 0.0
    %713 = vmatpush1.msra.mxu0 %v179
    %714 = vmatprep.subr.mxu0 0.0
    %715 = vmatpush1.msra.mxu0 %v180
    %716 = vmatprep.subr.mxu0 0.0
    %717 = vmatpush1.msra.mxu0 0.0
    %718 = vmatprep.subr.mxu0 0.0
    %719 = vmatpush1.msra.mxu0 0.0
    %720 = vmatprep.subr.mxu0 0.0
    %721 = vmatpush1.msra.mxu0 0.0
    %722 = vmatprep.subr.mxu0 0.0
    %723 = vmatpush1.msra.mxu0 0.0
    %724 = vmatprep.subr.mxu0 0.0
    %725 = vmatpush1.msra.mxu0 0.0
    %726 = vmatprep.subr.mxu0 0.0
    %727 = vmatpush1.msra.mxu0 0.0
    %728 = vmatprep.subr.mxu0 0.0
    %729 = vmatpush1.msra.mxu0 0.0
    %730 = vmatprep.subr.mxu0 0.0
    %731 = vmatpush1.msra.mxu0 0.0
    %732 = vmatprep.subr.mxu0 0.0
    %733 = vmatpush1.msra.mxu0 0.0
    %734 = vmatprep.subr.mxu0 0.0
    %735 = vmatpush1.msra.mxu0 0.0
    %736 = vmatprep.subr.mxu0 0.0
    %737 = vmatpush1.msra.mxu0 0.0
    %738 = vmatprep.subr.mxu0 0.0
    %739 = vmatpush1.msra.mxu0 0.0
    %740 = vmatprep.subr.mxu0 0.0
    %741 = vmatpush1.msra.mxu0 0.0
    %742 = vmatprep.subr.mxu0 0.0
    %743 = vmatpush1.msra.mxu0 0.0
    %744 = vmatprep.subr.mxu0 0.0
    %745 = vmatpush1.msra.mxu0 0.0
    %746 = vmatprep.subr.mxu0 0.0
    %747 = vmatpush1.msra.mxu0 0.0
    %748 = vmatprep.subr.mxu0 0.0
    %749 = vmatpush1.msra.mxu0 0.0
    %750 = vmatprep.subr.mxu0 0.0
    %751 = vmatpush1.msra.mxu0 0.0
    %752 = vmatprep.subr.mxu0 0.0
    %753 = vmatpush1.msra.mxu0 0.0
    %754 = vmatprep.subr.mxu0 0.0
    %755 = vmatpush1.msra.mxu0 0.0
    %756 = vmatprep.subr.mxu0 0.0
    %757 = vmatpush1.msra.mxu0 0.0
    %758 = vmatprep.subr.mxu0 0.0
    %759 = vmatpush1.msra.mxu0 0.0
    %760 = vmatprep.subr.mxu0 0.0
    %761 = vmatpush1.msra.mxu0 0.0
    %762 = vmatprep.subr.mxu0 0.0
    %763 = vmatpush1.msra.mxu0 0.0
    %764 = vmatprep.subr.mxu0 0.0
    %765 = vmatpush1.msra.mxu0 0.0
    %766 = vmatprep.subr.mxu0 0.0
    %767 = vmatpush1.msra.mxu0 0.0
    %768 = vmatprep.subr.mxu0 0.0
    %769 = vmatpush1.msra.mxu0 0.0
    %770 = vmatprep.subr.mxu0 0.0
    %771 = vmatpush1.msra.mxu0 0.0
    %772 = vmatprep.mubr.f32.mxu0 0.0
    %773 = vmatmul.mubr.f32.gmra.mrb[0].mxu0 %v706
    %v774 = vpop.f32.mrb[0].mxu0
    %v775 = vadd.f32 0.0, %v774
    %v776 = vpop.f32.mrb[0].mxu0
    %777 = vdwg.mxu0
    %v778 = vadd.f32 %v705, %v775
    %v779 = vxor.u32 %v778, 2147483648
    %v780 = vmul.f32 %v779, 1.442695
    %v781 = vpow.pop %v780
    %v782 = vadd.f32 %v781, 1.0
    %v783 = vrcp.pop %v782
    %v784 = vmul.f32 1.0, %v783
    %v785 = vtanh.pop %v778
    %v786 = vmul.f32 %v784, %v692
    %788 = vrot.lane.b32.xlu0 %v785, 32
    %v789 = vpop.permute.xlu0 %788
    %v791 = vmul.f32 %v784, %v789
    %793 = vrot.lane.b32.xlu0 %v791, 32
    %v794 = vpop.permute.xlu0 %793
    %v796 = vadd.f32 %v786, %v794
    %v797 = vtanh.pop %v796
    %799 = vrot.lane.b32.xlu0 %v797, 32
    %v800 = vpop.permute.xlu0 %799
    %v802 = vmul.f32 %v784, %v800
    %804 = vrot.lane.b32.xlu0 %v802, 64
    %v805 = vpop.permute.xlu0 %804
    %807 = vst.msk [vmem:[#allocation3 + $0xa] sm:$0x3] %vm285, %v805
    %808 = vst.msk [vmem:[#allocation3 + $0x4] sm:$0x3] %vm287, %v805
    %v809 = vld [vmem:[#allocation2 + $0xc] sm:$0x3]
    %v810 = vsel %vm182, %v805, 0
    %812 = vmatprep.subr.mxu0 0.0
    %813 = vmatpush1.msra.mxu0 %v177
    %814 = vmatprep.subr.mxu0 0.0
    %815 = vmatpush1.msra.mxu0 %v178
    %816 = vmatprep.subr.mxu0 0.0
    %817 = vmatpush1.msra.mxu0 %v179
    %818 = vmatprep.subr.mxu0 0.0
    %819 = vmatpush1.msra.mxu0 %v180
    %820 = vmatprep.subr.mxu0 0.0
    %821 = vmatpush1.msra.mxu0 0.0
    %822 = vmatprep.subr.mxu0 0.0
    %823 = vmatpush1.msra.mxu0 0.0
    %824 = vmatprep.subr.mxu0 0.0
    %825 = vmatpush1.msra.mxu0 0.0
    %826 = vmatprep.subr.mxu0 0.0
    %827 = vmatpush1.msra.mxu0 0.0
    %828 = vmatprep.subr.mxu0 0.0
    %829 = vmatpush1.msra.mxu0 0.0
    %830 = vmatprep.subr.mxu0 0.0
    %831 = vmatpush1.msra.mxu0 0.0
    %832 = vmatprep.subr.mxu0 0.0
    %833 = vmatpush1.msra.mxu0 0.0
    %834 = vmatprep.subr.mxu0 0.0
    %835 = vmatpush1.msra.mxu0 0.0
    %836 = vmatprep.subr.mxu0 0.0
    %837 = vmatpush1.msra.mxu0 0.0
    %838 = vmatprep.subr.mxu0 0.0
    %839 = vmatpush1.msra.mxu0 0.0
    %840 = vmatprep.subr.mxu0 0.0
    %841 = vmatpush1.msra.mxu0 0.0
    %842 = vmatprep.subr.mxu0 0.0
    %843 = vmatpush1.msra.mxu0 0.0
    %844 = vmatprep.subr.mxu0 0.0
    %845 = vmatpush1.msra.mxu0 0.0
    %846 = vmatprep.subr.mxu0 0.0
    %847 = vmatpush1.msra.mxu0 0.0
    %848 = vmatprep.subr.mxu0 0.0
    %849 = vmatpush1.msra.mxu0 0.0
    %850 = vmatprep.subr.mxu0 0.0
    %851 = vmatpush1.msra.mxu0 0.0
    %852 = vmatprep.subr.mxu0 0.0
    %853 = vmatpush1.msra.mxu0 0.0
    %854 = vmatprep.subr.mxu0 0.0
    %855 = vmatpush1.msra.mxu0 0.0
    %856 = vmatprep.subr.mxu0 0.0
    %857 = vmatpush1.msra.mxu0 0.0
    %858 = vmatprep.subr.mxu0 0.0
    %859 = vmatpush1.msra.mxu0 0.0
    %860 = vmatprep.subr.mxu0 0.0
    %861 = vmatpush1.msra.mxu0 0.0
    %862 = vmatprep.subr.mxu0 0.0
    %863 = vmatpush1.msra.mxu0 0.0
    %864 = vmatprep.subr.mxu0 0.0
    %865 = vmatpush1.msra.mxu0 0.0
    %866 = vmatprep.subr.mxu0 0.0
    %867 = vmatpush1.msra.mxu0 0.0
    %868 = vmatprep.subr.mxu0 0.0
    %869 = vmatpush1.msra.mxu0 0.0
    %870 = vmatprep.subr.mxu0 0.0
    %871 = vmatpush1.msra.mxu0 0.0
    %872 = vmatprep.subr.mxu0 0.0
    %873 = vmatpush1.msra.mxu0 0.0
    %874 = vmatprep.subr.mxu0 0.0
    %875 = vmatpush1.msra.mxu0 0.0
    %876 = vmatprep.mubr.f32.mxu0 0.0
    %877 = vmatmul.mubr.f32.gmra.mrb[0].mxu0 %v810
    %v878 = vpop.f32.mrb[0].mxu0
    %v879 = vadd.f32 0.0, %v878
    %v880 = vpop.f32.mrb[0].mxu0
    %881 = vdwg.mxu0
    %v882 = vadd.f32 %v809, %v879
    %v883 = vxor.u32 %v882, 2147483648
    %v884 = vmul.f32 %v883, 1.442695
    %v885 = vpow.pop %v884
    %v886 = vadd.f32 %v885, 1.0
    %v887 = vrcp.pop %v886
    %v888 = vmul.f32 1.0, %v887
    %v889 = vtanh.pop %v882
    %v890 = vmul.f32 %v888, %v796
    %892 = vrot.lane.b32.xlu0 %v889, 32
    %v893 = vpop.permute.xlu0 %892
    %v895 = vmul.f32 %v888, %v893
    %897 = vrot.lane.b32.xlu0 %v895, 32
    %v898 = vpop.permute.xlu0 %897
    %v900 = vadd.f32 %v890, %v898
    %v901 = vtanh.pop %v900
    %903 = vrot.lane.b32.xlu0 %v901, 32
    %v904 = vpop.permute.xlu0 %903
    %v906 = vmul.f32 %v888, %v904
    %908 = vrot.lane.b32.xlu0 %v906, 64
    %v909 = vpop.permute.xlu0 %908
    %911 = vst.msk [vmem:[#allocation3 + $0xc] sm:$0x3] %vm285, %v909
    %912 = vst.msk [vmem:[#allocation3 + $0x2] sm:$0x3] %vm287, %v909
    %v913 = vld [vmem:[#allocation2 + $0xe] sm:$0x3]
    %v914 = vsel %vm182, %v909, 0
    %916 = vmatprep.subr.mxu0 0.0
    %917 = vmatpush1.msra.mxu0 %v177
    %918 = vmatprep.subr.mxu0 0.0
    %919 = vmatpush1.msra.mxu0 %v178
    %920 = vmatprep.subr.mxu0 0.0
    %921 = vmatpush1.msra.mxu0 %v179
    %922 = vmatprep.subr.mxu0 0.0
    %923 = vmatpush1.msra.mxu0 %v180
    %924 = vmatprep.subr.mxu0 0.0
    %925 = vmatpush1.msra.mxu0 0.0
    %926 = vmatprep.subr.mxu0 0.0
    %927 = vmatpush1.msra.mxu0 0.0
    %928 = vmatprep.subr.mxu0 0.0
    %929 = vmatpush1.msra.mxu0 0.0
    %930 = vmatprep.subr.mxu0 0.0
    %931 = vmatpush1.msra.mxu0 0.0
    %932 = vmatprep.subr.mxu0 0.0
    %933 = vmatpush1.msra.mxu0 0.0
    %934 = vmatprep.subr.mxu0 0.0
    %935 = vmatpush1.msra.mxu0 0.0
    %936 = vmatprep.subr.mxu0 0.0
    %937 = vmatpush1.msra.mxu0 0.0
    %938 = vmatprep.subr.mxu0 0.0
    %939 = vmatpush1.msra.mxu0 0.0
    %940 = vmatprep.subr.mxu0 0.0
    %941 = vmatpush1.msra.mxu0 0.0
    %942 = vmatprep.subr.mxu0 0.0
    %943 = vmatpush1.msra.mxu0 0.0
    %944 = vmatprep.subr.mxu0 0.0
    %945 = vmatpush1.msra.mxu0 0.0
    %946 = vmatprep.subr.mxu0 0.0
    %947 = vmatpush1.msra.mxu0 0.0
    %948 = vmatprep.subr.mxu0 0.0
    %949 = vmatpush1.msra.mxu0 0.0
    %950 = vmatprep.subr.mxu0 0.0
    %951 = vmatpush1.msra.mxu0 0.0
    %952 = vmatprep.subr.mxu0 0.0
    %953 = vmatpush1.msra.mxu0 0.0
    %954 = vmatprep.subr.mxu0 0.0
    %955 = vmatpush1.msra.mxu0 0.0
    %956 = vmatprep.subr.mxu0 0.0
    %957 = vmatpush1.msra.mxu0 0.0
    %958 = vmatprep.subr.mxu0 0.0
    %959 = vmatpush1.msra.mxu0 0.0
    %960 = vmatprep.subr.mxu0 0.0
    %961 = vmatpush1.msra.mxu0 0.0
    %962 = vmatprep.subr.mxu0 0.0
    %963 = vmatpush1.msra.mxu0 0.0
    %964 = vmatprep.subr.mxu0 0.0
    %965 = vmatpush1.msra.mxu0 0.0
    %966 = vmatprep.subr.mxu0 0.0
    %967 = vmatpush1.msra.mxu0 0.0
    %968 = vmatprep.subr.mxu0 0.0
    %969 = vmatpush1.msra.mxu0 0.0
    %970 = vmatprep.subr.mxu0 0.0
    %971 = vmatpush1.msra.mxu0 0.0
    %972 = vmatprep.subr.mxu0 0.0
    %973 = vmatpush1.msra.mxu0 0.0
    %974 = vmatprep.subr.mxu0 0.0
    %975 = vmatpush1.msra.mxu0 0.0
    %976 = vmatprep.subr.mxu0 0.0
    %977 = vmatpush1.msra.mxu0 0.0
    %978 = vmatprep.subr.mxu0 0.0
    %979 = vmatpush1.msra.mxu0 0.0
    %980 = vmatprep.mubr.f32.mxu0 0.0
    %981 = vmatmul.mubr.f32.gmra.mrb[0].mxu0 %v914
    %v982 = vpop.f32.mrb[0].mxu0
    %v983 = vadd.f32 0.0, %v982
    %v984 = vpop.f32.mrb[0].mxu0
    %985 = vdwg.mxu0
    %v986 = vadd.f32 %v913, %v983
    %v987 = vxor.u32 %v986, 2147483648
    %v988 = vmul.f32 %v987, 1.442695
    %v989 = vpow.pop %v988
    %v990 = vadd.f32 %v989, 1.0
    %v991 = vrcp.pop %v990
    %v992 = vmul.f32 1.0, %v991
    %v993 = vtanh.pop %v986
    %v994 = vmul.f32 %v992, %v900
    %996 = vrot.lane.b32.xlu0 %v993, 32
    %v997 = vpop.permute.xlu0 %996
    %v999 = vmul.f32 %v992, %v997
    %1001 = vrot.lane.b32.xlu0 %v999, 32
    %v1002 = vpop.permute.xlu0 %1001
    %v1004 = vadd.f32 %v994, %v1002
    %v1005 = vtanh.pop %v1004
    %1007 = vrot.lane.b32.xlu0 %v1005, 32
    %v1008 = vpop.permute.xlu0 %1007
    %v1010 = vmul.f32 %v992, %v1008
    %1012 = vrot.lane.b32.xlu0 %v1010, 64
    %v1013 = vpop.permute.xlu0 %1012
    %1015 = vst.msk [vmem:[#allocation3 + $0xe] sm:$0x3] %vm285, %v1013
    %1016 = vst.msk [vmem:[#allocation3] sm:$0x3] %vm287, %v1013
    %v1017 = vld [vmem:[#allocation3] sm:$0xff]
    %v1018 = vld [vmem:[#allocation3 + $0x8] sm:$0xff]
    %v1019 = vld [vmem:[#allocation8] sm:$0xff]
    %v1020 = vld [vmem:[#allocation8 + $0x8] sm:$0xff]
    %v1021 = vld [vmem:[#allocation8 + $0x10] sm:$0xff]
    %v1022 = vld [vmem:[#allocation8 + $0x18] sm:$0xff]
    %v1023 = vld [vmem:[%s1] sm:$0xff]
    %v1024 = vld [vmem:[%s1 + $0x8] sm:$0xff]
    %v1025 = vld [vmem:[%s6] sm:$0x1f]
    %vm1026 = vcmask 39936
    %v1028 = vsel %vm1026, %v1023, 0
    %v1031 = vsel %vm1026, %v1024, 0
    %vm1033 = vcmask 1044480
    %v1035 = vsel %vm1033, %v1025, 0
    %1037 = vmatprep.subr.mxu0 0.0
    %1038 = vmatpush1.msra.mxu0 %v1035
    %1039 = vmatprep.subr.mxu0 0.0
    %1040 = vmatpush1.msra.mxu0 0.0
    %1041 = vmatprep.subr.mxu0 0.0
    %1042 = vmatpush1.msra.mxu0 0.0
    %1043 = vmatprep.subr.mxu0 0.0
    %1044 = vmatpush1.msra.mxu0 0.0
    %1045 = vmatprep.subr.mxu0 0.0
    %1046 = vmatpush1.msra.mxu0 0.0
    %1047 = vmatprep.subr.mxu0 0.0
    %1048 = vmatpush1.msra.mxu0 0.0
    %1049 = vmatprep.subr.mxu0 0.0
    %1050 = vmatpush1.msra.mxu0 0.0
    %1051 = vmatprep.subr.mxu0 0.0
    %1052 = vmatpush1.msra.mxu0 0.0
    %1053 = vmatprep.subr.mxu0 0.0
    %1054 = vmatpush1.msra.mxu0 0.0
    %1055 = vmatprep.subr.mxu0 0.0
    %1056 = vmatpush1.msra.mxu0 0.0
    %1057 = vmatprep.subr.mxu0 0.0
    %1058 = vmatpush1.msra.mxu0 0.0
    %1059 = vmatprep.subr.mxu0 0.0
    %1060 = vmatpush1.msra.mxu0 0.0
    %1061 = vmatprep.subr.mxu0 0.0
    %1062 = vmatpush1.msra.mxu0 0.0
    %1063 = vmatprep.subr.mxu0 0.0
    %1064 = vmatpush1.msra.mxu0 0.0
    %1065 = vmatprep.subr.mxu0 0.0
    %1066 = vmatpush1.msra.mxu0 0.0
    %1067 = vmatprep.subr.mxu0 0.0
    %1068 = vmatpush1.msra.mxu0 0.0
    %1069 = vmatprep.subr.mxu0 0.0
    %1070 = vmatpush1.msra.mxu0 0.0
    %1071 = vmatprep.subr.mxu0 0.0
    %1072 = vmatpush1.msra.mxu0 0.0
    %1073 = vmatprep.subr.mxu0 0.0
    %1074 = vmatpush1.msra.mxu0 0.0
    %1075 = vmatprep.subr.mxu0 0.0
    %1076 = vmatpush1.msra.mxu0 0.0
    %1077 = vmatprep.subr.mxu0 0.0
    %1078 = vmatpush1.msra.mxu0 0.0
    %1079 = vmatprep.subr.mxu0 0.0
    %1080 = vmatpush1.msra.mxu0 0.0
    %1081 = vmatprep.subr.mxu0 0.0
    %1082 = vmatpush1.msra.mxu0 0.0
    %1083 = vmatprep.subr.mxu0 0.0
    %1084 = vmatpush1.msra.mxu0 0.0
    %1085 = vmatprep.subr.mxu0 0.0
    %1086 = vmatpush1.msra.mxu0 0.0
    %1087 = vmatprep.subr.mxu0 0.0
    %1088 = vmatpush1.msra.mxu0 0.0
    %1089 = vmatprep.subr.mxu0 0.0
    %1090 = vmatpush1.msra.mxu0 0.0
    %1091 = vmatprep.subr.mxu0 0.0
    %1092 = vmatpush1.msra.mxu0 0.0
    %1093 = vmatprep.subr.mxu0 0.0
    %1094 = vmatpush1.msra.mxu0 0.0
    %1095 = vmatprep.subr.mxu0 0.0
    %1096 = vmatpush1.msra.mxu0 0.0
    %1097 = vmatprep.subr.mxu0 0.0
    %1098 = vmatpush1.msra.mxu0 0.0
    %1099 = vmatprep.subr.mxu0 0.0
    %1100 = vmatpush1.msra.mxu0 0.0
    %1101 = vmatprep.mubr.f32.mxu0 0.0
    %1102 = vmatmul.mubr.f32.gmra.mrb[0].mxu0 %v1028
    %v1103 = vpop.f32.mrb[0].mxu0
    %v1104 = vadd.f32 0.0, %v1103
    %v1105 = vpop.f32.mrb[0].mxu0
    %1106 = vmatprep.mubr.f32.mxu0 0.0
    %1107 = vmatmul.mubr.f32.gmra.mrb[0].mxu0 %v1031
    %v1108 = vpop.f32.mrb[0].mxu0
    %v1109 = vadd.f32 0.0, %v1108
    %v1110 = vpop.f32.mrb[0].mxu0
    %1111 = vdwg.mxu0
    %v1113 = vsel %vm182, %v1017, 0
    %v1116 = vsel %vm182, %v1018, 0
    %1118 = vmatprep.subr.mxu0 0.0
    %1119 = vmatpush1.msra.mxu0 %v1019
    %1120 = vmatprep.subr.mxu0 0.0
    %1121 = vmatpush1.msra.mxu0 %v1020
    %1122 = vmatprep.subr.mxu0 0.0
    %1123 = vmatpush1.msra.mxu0 %v1021
    %1124 = vmatprep.subr.mxu0 0.0
    %1125 = vmatpush1.msra.mxu0 %v1022
    %1126 = vmatprep.subr.mxu0 0.0
    %1127 = vmatpush1.msra.mxu0 0.0
    %1128 = vmatprep.subr.mxu0 0.0
    %1129 = vmatpush1.msra.mxu0 0.0
    %1130 = vmatprep.subr.mxu0 0.0
    %1131 = vmatpush1.msra.mxu0 0.0
    %1132 = vmatprep.subr.mxu0 0.0
    %1133 = vmatpush1.msra.mxu0 0.0
    %1134 = vmatprep.subr.mxu0 0.0
    %1135 = vmatpush1.msra.mxu0 0.0
    %1136 = vmatprep.subr.mxu0 0.0
    %1137 = vmatpush1.msra.mxu0 0.0
    %1138 = vmatprep.subr.mxu0 0.0
    %1139 = vmatpush1.msra.mxu0 0.0
    %1140 = vmatprep.subr.mxu0 0.0
    %1141 = vmatpush1.msra.mxu0 0.0
    %1142 = vmatprep.subr.mxu0 0.0
    %1143 = vmatpush1.msra.mxu0 0.0
    %1144 = vmatprep.subr.mxu0 0.0
    %1145 = vmatpush1.msra.mxu0 0.0
    %1146 = vmatprep.subr.mxu0 0.0
    %1147 = vmatpush1.msra.mxu0 0.0
    %1148 = vmatprep.subr.mxu0 0.0
    %1149 = vmatpush1.msra.mxu0 0.0
    %1150 = vmatprep.subr.mxu0 0.0
    %1151 = vmatpush1.msra.mxu0 0.0
    %1152 = vmatprep.subr.mxu0 0.0
    %1153 = vmatpush1.msra.mxu0 0.0
    %1154 = vmatprep.subr.mxu0 0.0
    %1155 = vmatpush1.msra.mxu0 0.0
    %1156 = vmatprep.subr.mxu0 0.0
    %1157 = vmatpush1.msra.mxu0 0.0
    %1158 = vmatprep.subr.mxu0 0.0
    %1159 = vmatpush1.msra.mxu0 0.0
    %1160 = vmatprep.subr.mxu0 0.0
    %1161 = vmatpush1.msra.mxu0 0.0
    %1162 = vmatprep.subr.mxu0 0.0
    %1163 = vmatpush1.msra.mxu0 0.0
    %1164 = vmatprep.subr.mxu0 0.0
    %1165 = vmatpush1.msra.mxu0 0.0
    %1166 = vmatprep.subr.mxu0 0.0
    %1167 = vmatpush1.msra.mxu0 0.0
    %1168 = vmatprep.subr.mxu0 0.0
    %1169 = vmatpush1.msra.mxu0 0.0
    %1170 = vmatprep.subr.mxu0 0.0
    %1171 = vmatpush1.msra.mxu0 0.0
    %1172 = vmatprep.subr.mxu0 0.0
    %1173 = vmatpush1.msra.mxu0 0.0
    %1174 = vmatprep.subr.mxu0 0.0
    %1175 = vmatpush1.msra.mxu0 0.0
    %1176 = vmatprep.subr.mxu0 0.0
    %1177 = vmatpush1.msra.mxu0 0.0
    %1178 = vmatprep.subr.mxu0 0.0
    %1179 = vmatpush1.msra.mxu0 0.0
    %1180 = vmatprep.subr.mxu0 0.0
    %1181 = vmatpush1.msra.mxu0 0.0
    %1182 = vmatprep.mubr.f32.mxu0 0.0
    %1183 = vmatmul.mubr.f32.gmra.mrb[0].mxu0 %v1113
    %v1184 = vpop.f32.mrb[0].mxu0
    %v1185 = vadd.f32 %v1104, %v1184
    %v1186 = vpop.f32.mrb[0].mxu0
    %1187 = vmatprep.mubr.f32.mxu0 0.0
    %1188 = vmatmul.mubr.f32.gmra.mrb[0].mxu0 %v1116
    %v1189 = vpop.f32.mrb[0].mxu0
    %v1190 = vadd.f32 %v1109, %v1189
    %v1191 = vpop.f32.mrb[0].mxu0
    %1192 = vdwg.mxu0
    %v1193 = vld [vmem:[%s7] sm:$0x1]
    %v1195 = vlaneseq
    %v1196 = vshrl.u32 %v1195, 7
    %v1197 = vsub.s32 0, %v1196
    %v1198 = vrot.slane %v1193, %v1197
    %v1200 = vadd.f32 %v1185, %v1198
    %v1201 = vadd.f32 %v1190, %v1198
    %v1202 = vtanh.pop %v1200
    %v1203 = vtanh.pop %v1201
    %v1204 = vld [vmem:[%s8] sm:$0xff]
    %v1205 = vld [vmem:[%s8 + $0x8] sm:$0xff]
    %v1206 = vld [vmem:[%s8 + $0x10] sm:$0xff]
    %v1207 = vld [vmem:[%s8 + $0x18] sm:$0xff]
    %v1208 = vld [vmem:[%s8 + $0x20] sm:$0x1f]
    %v1209 = vld [vmem:[%s9] sm:$0x1]
    %v1211 = vlaneseq
    %v1212 = vshrl.u32 %v1211, 7
    %v1213 = vsub.s32 0, %v1212
    %v1214 = vrot.slane %v1209, %v1213
    %vm1216 = vcmask 302080
    %v1218 = vsel %vm1216, %v1202, 0
    %v1221 = vsel %vm1216, %v1203, 0
    %v1224 = vsel %vm1033, %v1208, 0
    %1226 = vmatprep.subr.mxu0 0.0
    %1227 = vmatpush1.msra.mxu0 %v1204
    %1228 = vmatprep.subr.mxu0 0.0
    %1229 = vmatpush1.msra.mxu0 %v1205
    %1230 = vmatprep.subr.mxu0 0.0
    %1231 = vmatpush1.msra.mxu0 %v1206
    %1232 = vmatprep.subr.mxu0 0.0
    %1233 = vmatpush1.msra.mxu0 %v1207
    %1234 = vmatprep.subr.mxu0 0.0
    %1235 = vmatpush1.msra.mxu0 %v1224
    %1236 = vmatprep.subr.mxu0 0.0
    %1237 = vmatpush1.msra.mxu0 0.0
    %1238 = vmatprep.subr.mxu0 0.0
    %1239 = vmatpush1.msra.mxu0 0.0
    %1240 = vmatprep.subr.mxu0 0.0
    %1241 = vmatpush1.msra.mxu0 0.0
    %1242 = vmatprep.subr.mxu0 0.0
    %1243 = vmatpush1.msra.mxu0 0.0
    %1244 = vmatprep.subr.mxu0 0.0
    %1245 = vmatpush1.msra.mxu0 0.0
    %1246 = vmatprep.subr.mxu0 0.0
    %1247 = vmatpush1.msra.mxu0 0.0
    %1248 = vmatprep.subr.mxu0 0.0
    %1249 = vmatpush1.msra.mxu0 0.0
    %1250 = vmatprep.subr.mxu0 0.0
    %1251 = vmatpush1.msra.mxu0 0.0
    %1252 = vmatprep.subr.mxu0 0.0
    %1253 = vmatpush1.msra.mxu0 0.0
    %1254 = vmatprep.subr.mxu0 0.0
    %1255 = vmatpush1.msra.mxu0 0.0
    %1256 = vmatprep.subr.mxu0 0.0
    %1257 = vmatpush1.msra.mxu0 0.0
    %1258 = vmatprep.subr.mxu0 0.0
    %1259 = vmatpush1.msra.mxu0 0.0
    %1260 = vmatprep.subr.mxu0 0.0
    %1261 = vmatpush1.msra.mxu0 0.0
    %1262 = vmatprep.subr.mxu0 0.0
    %1263 = vmatpush1.msra.mxu0 0.0
    %1264 = vmatprep.subr.mxu0 0.0
    %1265 = vmatpush1.msra.mxu0 0.0
    %1266 = vmatprep.subr.mxu0 0.0
    %1267 = vmatpush1.msra.mxu0 0.0
    %1268 = vmatprep.subr.mxu0 0.0
    %1269 = vmatpush1.msra.mxu0 0.0
    %1270 = vmatprep.subr.mxu0 0.0
    %1271 = vmatpush1.msra.mxu0 0.0
    %1272 = vmatprep.subr.mxu0 0.0
    %1273 = vmatpush1.msra.mxu0 0.0
    %1274 = vmatprep.subr.mxu0 0.0
    %1275 = vmatpush1.msra.mxu0 0.0
    %1276 = vmatprep.subr.mxu0 0.0
    %1277 = vmatpush1.msra.mxu0 0.0
    %1278 = vmatprep.subr.mxu0 0.0
    %1279 = vmatpush1.msra.mxu0 0.0
    %1280 = vmatprep.subr.mxu0 0.0
    %1281 = vmatpush1.msra.mxu0 0.0
    %1282 = vmatprep.subr.mxu0 0.0
    %1283 = vmatpush1.msra.mxu0 0.0
    %1284 = vmatprep.subr.mxu0 0.0
    %1285 = vmatpush1.msra.mxu0 0.0
    %1286 = vmatprep.subr.mxu0 0.0
    %1287 = vmatpush1.msra.mxu0 0.0
    %1288 = vmatprep.subr.mxu0 0.0
    %1289 = vmatpush1.msra.mxu0 0.0
    %1290 = vmatprep.mubr.f32.mxu0 0.0
    %1291 = vmatmul.mubr.f32.gmra.mrb[0].mxu0 %v1218
    %v1292 = vpop.f32.mrb[0].mxu0
    %v1293 = vadd.f32 %v1214, %v1292
    %v1294 = vpop.f32.mrb[0].mxu0
    %1295 = vmatprep.mubr.f32.mxu0 0.0
    %1296 = vmatmul.mubr.f32.gmra.mrb[0].mxu0 %v1221
    %v1297 = vpop.f32.mrb[0].mxu0
    %v1298 = vadd.f32 %v1214, %v1297
    %v1299 = vpop.f32.mrb[0].mxu0
    %1300 = vdwg.mxu0
    %v1301 = vsel %vm1026, %v1293, -inf
    %1302 = vmax.xlane.f32.xlu0 %v1301
    %v1303 = vpop.xlane.xlu0 %1302
    %v1304 = vsel %vm1026, %v1298, -inf
    %1305 = vmax.xlane.f32.xlu0 %v1304
    %v1306 = vpop.xlane.xlu0 %1305
    %v1307 = vsub.f32 %v1293, %v1303
    %v1308 = vsub.f32 %v1298, %v1306
    %v1309 = vmul.f32 %v1307, 1.442695
    %v1310 = vpow.pop %v1309
    %v1311 = vmul.f32 %v1308, 1.442695
    %v1312 = vpow.pop %v1311
    %v1313 = vsel %vm1026, %v1310, 0.0
    %1314 = vadd.xlane.f32.xlu0 %v1313
    %v1315 = vpop.xlane.xlu0 %1314
    %v1316 = vsel %vm1026, %v1312, 0.0
    %1317 = vadd.xlane.f32.xlu0 %v1316
    %v1318 = vpop.xlane.xlu0 %1317
    %v1319 = vrcp.pop %v1315
    %v1320 = vrcp.pop %v1318
    %v1321 = vmul.f32 %v1310, %v1319
    %v1322 = vmul.f32 %v1312, %v1320
    %1323 = vst.msk [vmem:[%s10] sm:$0xff] %vm1026, %v1321
    %1324 = vst.msk [vmem:[%s10 + $0x8] sm:$0xff] %vm1026, %v1322
    // Predicated region
    $region54: #{tpu_custom_call.1} parent=1 // pred_check
      _
    $region55: #{tpu_custom_call.1} parent=1 // pred_check_branch
      %1326 = sbr.rel (0) target = $region57
    $region56: #{tpu_custom_call.1} parent=1 // pred_region
      _
    $region57: #{tpu_custom_call.1} parent=1 // pred_fallthru
      _
    // Predicated region
    $region58: #{tpu_custom_call.1} parent=1 // pred_check
      _
    $region59: #{tpu_custom_call.1} parent=1 // pred_check_branch
      %1328 = sbr.rel (0) target = $region61
    $region60: #{tpu_custom_call.1} parent=1 // pred_region
      _
    $region61: #{tpu_custom_call.1} parent=1 // pred_fallthru
      _
    %1329 = vsyncpa [#allocation5], 1
    %1330 = vsyncpa [#allocation7], 1

</llo_original>
